<compile_context>
chip_gen: v7x
topology: tpu7x:2x2x1
jax: 0.10.0
libtpu: 0.0.40
codegen_flags: <defaults>
</compile_context>

<pallas_src>
from functools import partial

import jax
import jax.numpy as jnp
import numpy as np
from jax.experimental import pallas as pl
from jax.experimental.pallas import tpu as pltpu

_LANE = 128


def _round_up(x, m):
    return (x + m - 1) // m * m


def _afno1d_kernel(x_ref, w1_ref, w2_ref, b1_ref, b2_ref, o_ref, *,
                   lambd, compute_dtype):
    # x_ref : (2, 1, C, MT) compute_dtype   [0]=real, [1]=imag
    # w*_ref: (2, C, C)     compute_dtype   [W_r^T blockdiag, W_i^T blockdiag]
    # b*_ref: (2, C, 1)     f32
    # o_ref : (2, 1, C, MT) compute_dtype
    xr = x_ref[0, 0]                       # (C, MT)
    xi = x_ref[1, 0]
    w1r = w1_ref[0]
    w1i = w1_ref[1]

    def mm(w, v):                          # (C,C)@(C,MT) on the MXU, f32 acc
        return jnp.dot(w, v, preferred_element_type=jnp.float32)

    # ---- layer 1: complex matmul (4 real matmuls) + bias + ReLU ------------
    o1r = jnp.maximum(mm(w1r, xr) - mm(w1i, xi) + b1_ref[0], 0.0)
    o1i = jnp.maximum(mm(w1r, xi) + mm(w1i, xr) + b1_ref[1], 0.0)
    o1r = o1r.astype(compute_dtype)        # f32 versions die here
    o1i = o1i.astype(compute_dtype)

    def softshrink(v):
        return jnp.where(v > lambd, v - lambd,
                         jnp.where(v < -lambd, v + lambd, 0.0))

    # ---- layer 2: compute & store real BEFORE imag (smaller live set) ------
    w2r = w2_ref[0]
    w2i = w2_ref[1]
    o2r = mm(w2r, o1r) - mm(w2i, o1i) + b2_ref[0]
    o_ref[0, 0] = softshrink(o2r).astype(o_ref.dtype)
    o2i = mm(w2r, o1i) + mm(w2i, o1r) + b2_ref[1]
    o_ref[1, 0] = softshrink(o2i).astype(o_ref.dtype)


def _block_diag_t(w):
    """(nb, bs_in, bs_out) group weights -> block-diagonal (C_out, C_in).

    Rows are output channels, cols input channels, so the kernel computes
    out = W @ x with the same semantics as einsum('...il,...io->...ol').
    """
    nb, bi, bo = w.shape
    z = jnp.zeros((nb, bo, nb, bi), w.dtype)
    idx = jnp.arange(nb)
    z = z.at[idx, :, idx, :].set(jnp.swapaxes(w, -1, -2))
    return z.reshape(nb * bo, nb * bi)


def _tile_params():
    """Per-generation mode-tile cap and scoped-VMEM ceiling."""
    cap, ceiling = 512, 48 << 20           # safe on v7x (64 MiB VMEM / TC)
    try:
        if pltpu.get_tpu_info().vmem_capacity_bytes >= (100 << 20):
            cap, ceiling = 1024, 64 << 20  # v5e / v6e: 128 MiB physical VMEM
    except Exception:
        pass
    return cap, ceiling


def _vmem_limit_bytes(C, mt, itemsize, ceiling):
    act_block = 2 * C * mt * itemsize              # one (2,1,C,mt) block
    weights = 2 * (2 * C * C * itemsize)           # both weight packs
    biases = 2 * (2 * C * 4)
    scratch = 10 * C * mt * 4                      # f32 intermediates headroom
    need = 2 * 2 * act_block + 2 * (weights + biases) + scratch
    return int(min(max(need + (8 << 20), 32 << 20), ceiling))


def adaptive_fourier_1d(x, params, *, num_blocks, sparsity_threshold=0.01,
                        hard_thresholding_fraction=1.0,
                        compute_dtype=jnp.bfloat16):
    """Forward pass matching AdaptiveFourier1d.forward (hidden_size_factor=1)."""
    w1r, w1i, w2r, w2i, b1r, b1i, b2r, b2i = params
    B, C, N = x.shape
    assert C % num_blocks == 0
    M = N // 2 + 1
    kept = int(M * hard_thresholding_fraction)

    residual = x
    if kept == 0:
        # Everything is hard-thresholded away: spectral output is zero.
        return residual

    xf = jnp.fft.rfft(x.astype(jnp.float32), norm='ortho')     # (B, C, M) c64
    xr = jnp.real(xf)[..., :kept]                               # (B, C, kept)
    xi = jnp.imag(xf)[..., :kept]

    cap, vmem_ceiling = _tile_params()

    # ---- lane layout --------------------------------------------------------
    fold_batch = (kept <= _LANE) and (B * kept >= 2 * _LANE)
    if fold_batch:
        # Pack (batch, mode) tightly onto lanes: dense useful lanes per step
        # and still >= 2 grid steps for the two v7x TensorCores.
        L = B * kept
        xr = jnp.swapaxes(xr, 0, 1).reshape(C, L)[None]         # (1, C, L)
        xi = jnp.swapaxes(xi, 0, 1).reshape(C, L)[None]
        if L <= 256:
            mt = 128
        elif L <= 1024:
            mt = 256
        else:
            mt = 512
        Bg = 1
    else:
        L = kept
        kept128 = _round_up(kept, _LANE)
        mt = kept128 if kept128 <= cap else cap
        Bg = B
    Lp = _round_up(L, mt)
    if Lp > L:
        pad = ((0, 0), (0, 0), (0, Lp - L))
        xr = jnp.pad(xr, pad)
        xi = jnp.pad(xi, pad)
    num_mt = Lp // mt

    # Single stacked activation tensor, compute_dtype for the MXU.
    x_stack = jnp.stack([xr, xi], axis=0).astype(compute_dtype)  # (2,Bg,C,Lp)

    # Block-diagonal weight packs (C,C) and flat biases (C,1).
    w1_pack = jnp.stack([_block_diag_t(w1r), _block_diag_t(w1i)],
                        axis=0).astype(compute_dtype)            # (2, C, C)
    w2_pack = jnp.stack([_block_diag_t(w2r), _block_diag_t(w2i)],
                        axis=0).astype(compute_dtype)
    b1_pack = jnp.stack([b1r.reshape(C, 1), b1i.reshape(C, 1)],
                        axis=0).astype(jnp.float32)              # (2, C, 1)
    b2_pack = jnp.stack([b2r.reshape(C, 1), b2i.reshape(C, 1)],
                        axis=0).astype(jnp.float32)

    kernel = partial(_afno1d_kernel, lambd=float(sparsity_threshold),
                     compute_dtype=compute_dtype)

    act_spec = pl.BlockSpec((2, 1, C, mt), lambda b, m: (0, b, 0, m))
    w_spec = pl.BlockSpec((2, C, C), lambda b, m: (0, 0, 0))
    bias_spec = pl.BlockSpec((2, C, 1), lambda b, m: (0, 0, 0))

    itemsize = jnp.dtype(compute_dtype).itemsize
    out = pl.pallas_call(
        kernel,
        out_shape=jax.ShapeDtypeStruct((2, Bg, C, Lp), compute_dtype),
        grid=(Bg, num_mt),
        in_specs=[act_spec, w_spec, w_spec, bias_spec, bias_spec],
        out_specs=act_spec,
        compiler_params=pltpu.CompilerParams(
            dimension_semantics=("parallel", "parallel"),
            vmem_limit_bytes=_vmem_limit_bytes(C, mt, itemsize, vmem_ceiling)),
    )(x_stack, w1_pack, w2_pack, b1_pack, b2_pack)

    # Drop lane padding, undo the batch fold, re-attach the zeroed mode tail.
    if fold_batch:
        o = out[:, 0, :, :B * kept].reshape(2, C, B, kept)
        o = jnp.swapaxes(o, 1, 2)                                # (2, B, C, kept)
    else:
        o = out[..., :kept]                                      # (2, B, C, kept)
    o = o.astype(jnp.float32)
    out_r, out_i = o[0], o[1]
    if kept < M:
        tail = ((0, 0), (0, 0), (0, M - kept))
        out_r = jnp.pad(out_r, tail)
        out_i = jnp.pad(out_i, tail)

    out_c = out_r + 1j * out_i                                   # (B, C, M) c64
    y = jnp.fft.irfft(out_c, n=N, norm='ortho')
    return y.astype(x.dtype) + residual


def _ref_forward(x, params, *, num_blocks, sparsity_threshold,
                 hard_thresholding_fraction):
    """Pure-JAX reference mirroring the PyTorch forward (for sanity check)."""
    w1r, w1i, w2r, w2i, b1r, b1i, b2r, b2i = params
    B, C, N = x.shape
    bs = C // num_blocks
    M = N // 2 + 1
    kept = int(M * hard_thresholding_fraction)
    residual = x
    xf = jnp.fft.rfft(x.astype(jnp.float32), norm='ortho').reshape(
        B, num_blocks, bs, M)
    w1 = w1r + 1j * w1i
    w2 = w2r + 1j * w2i
    b1 = b1r + 1j * b1i
    b2 = b2r + 1j * b2i
    o1 = jnp.einsum('bgil,gio->bgol', xf[..., :kept], w1) + b1[:, :, None]
    o1 = jnp.maximum(o1.real, 0.0) + 1j * jnp.maximum(o1.imag, 0.0)
    o2 = jnp.einsum('bgil,gio->bgol', o1, w2) + b2[:, :, None]
    lam = sparsity_threshold
    ss = lambda v: jnp.where(v > lam, v - lam, jnp.where(v < -lam, v + lam, 0.0))
    o2 = ss(o2.real) + 1j * ss(o2.imag)
    out = jnp.zeros((B, num_blocks, bs, M), jnp.complex64).at[..., :kept].set(o2)
    y = jnp.fft.irfft(out.reshape(B, C, M), n=N, norm='ortho')
    return y.astype(x.dtype) + residual


if __name__ == "__main__":
    num_blocks = 4
    sparsity_threshold = 0.01
    scale = 0.02

    def make_inputs(B, C, N, seed=0):
        key = jax.random.PRNGKey(seed)
        kx, *kp = jax.random.split(key, 9)
        bs = C // num_blocks
        x = jax.random.normal(kx, (B, C, N), dtype=jnp.float32)
        # torch.rand on cfloat draws real & imag independently from U[0,1)
        w1r = scale * jax.random.uniform(kp[0], (num_blocks, bs, bs), jnp.float32)
        w1i = scale * jax.random.uniform(kp[1], (num_blocks, bs, bs), jnp.float32)
        w2r = scale * jax.random.uniform(kp[2], (num_blocks, bs, bs), jnp.float32)
        w2i = scale * jax.random.uniform(kp[3], (num_blocks, bs, bs), jnp.float32)
        b1r = scale * jax.random.uniform(kp[4], (num_blocks, bs), jnp.float32)
        b1i = scale * jax.random.uniform(kp[5], (num_blocks, bs), jnp.float32)
        b2r = scale * jax.random.uniform(kp[6], (num_blocks, bs), jnp.float32)
        b2i = scale * jax.random.uniform(kp[7], (num_blocks, bs), jnp.float32)
        return x, (w1r, w1i, w2r, w2i, b1r, b1i, b2r, b2i)

    def check(B, C, N, frac, compute_dtype, tol):
        x, params = make_inputs(B, C, N)
        ref = jax.block_until_ready(_ref_forward(
            x, params, num_blocks=num_blocks,
            sparsity_threshold=sparsity_threshold,
            hard_thresholding_fraction=frac))
        out = jax.block_until_ready(adaptive_fourier_1d(
            x, params, num_blocks=num_blocks,
            sparsity_threshold=sparsity_threshold,
            hard_thresholding_fraction=frac,
            compute_dtype=compute_dtype))
        assert out.shape == (B, C, N) and out.dtype == x.dtype
        np.testing.assert_allclose(np.asarray(out), np.asarray(ref),
                                   atol=tol, rtol=tol)

    # Base config (B=2, hidden=32, N=16): f32 MXU path tight, bf16 path loose.
    check(2, 32, 16, 1.0, jnp.float32, 2e-5)
    check(2, 32, 16, 1.0, jnp.bfloat16, 5e-3)
    # Batch-folded lane-packing path (kept <= 128 and B*kept >= 256).
    check(32, 32, 16, 1.0, jnp.float32, 2e-5)
    # Hard-thresholding path (kept < total modes).
    check(2, 32, 16, 0.5, jnp.float32, 2e-5)

    print("KERNEL_OK")
</pallas_src>

<mosaic_0001>
module attributes {stable_mosaic.version = 11 : i64} {
  func.func @_afno1d_kernel(%arg0: i32, %arg1: i32, %arg2: memref<2x1x32x128xf32, #tpu.memory_space<vmem>>, %arg3: memref<2x32x32xf32, #tpu.memory_space<vmem>>, %arg4: memref<2x32x32xf32, #tpu.memory_space<vmem>>, %arg5: memref<2x32x1xf32, #tpu.memory_space<vmem>>, %arg6: memref<2x32x1xf32, #tpu.memory_space<vmem>>, %arg7: memref<2x1x32x128xf32, #tpu.memory_space<vmem>>) attributes {dimension_semantics = [#tpu.dimension_semantics<parallel>, #tpu.dimension_semantics<parallel>], iteration_bounds = array<i64: 2, 1>, scalar_prefetch = 0 : i64, scratch_operands = 0 : i64, tpu.core_type = #tpu.core_type<tc>, window_params = [{transform_indices = @transform_0, window_bounds = array<i64: 2, 1, 32, 128>}, {pipeline_mode = #tpu.pipeline_mode<synchronous>, transform_indices = @transform_1, window_bounds = array<i64: 2, 32, 32>}, {pipeline_mode = #tpu.pipeline_mode<synchronous>, transform_indices = @transform_2, window_bounds = array<i64: 2, 32, 32>}, {pipeline_mode = #tpu.pipeline_mode<synchronous>, transform_indices = @transform_3, window_bounds = array<i64: 2, 32, 1>}, {pipeline_mode = #tpu.pipeline_mode<synchronous>, transform_indices = @transform_4, window_bounds = array<i64: 2, 32, 1>}, {transform_indices = @transform_5, window_bounds = array<i64: 2, 1, 32, 128>}]} {
    %c0 = arith.constant 0 : index
    %c0_0 = arith.constant 0 : index
    %c0_1 = arith.constant 0 : index
    %c0_2 = arith.constant 0 : index
    %0 = vector.load %arg2[%c0, %c0_0, %c0_1, %c0_2] : memref<2x1x32x128xf32, #tpu.memory_space<vmem>>, vector<1x1x32x128xf32>
    %1 = vector.shape_cast %0 : vector<1x1x32x128xf32> to vector<32x128xf32>
    %c1 = arith.constant 1 : index
    %c0_3 = arith.constant 0 : index
    %c0_4 = arith.constant 0 : index
    %c0_5 = arith.constant 0 : index
    %2 = vector.load %arg2[%c1, %c0_3, %c0_4, %c0_5] : memref<2x1x32x128xf32, #tpu.memory_space<vmem>>, vector<1x1x32x128xf32>
    %3 = vector.shape_cast %2 : vector<1x1x32x128xf32> to vector<32x128xf32>
    %c0_6 = arith.constant 0 : index
    %c0_7 = arith.constant 0 : index
    %c0_8 = arith.constant 0 : index
    %4 = vector.load %arg3[%c0_6, %c0_7, %c0_8] : memref<2x32x32xf32, #tpu.memory_space<vmem>>, vector<1x32x32xf32>
    %5 = vector.shape_cast %4 : vector<1x32x32xf32> to vector<32x32xf32>
    %c1_9 = arith.constant 1 : index
    %c0_10 = arith.constant 0 : index
    %c0_11 = arith.constant 0 : index
    %6 = vector.load %arg3[%c1_9, %c0_10, %c0_11] : memref<2x32x32xf32, #tpu.memory_space<vmem>>, vector<1x32x32xf32>
    %7 = vector.shape_cast %6 : vector<1x32x32xf32> to vector<32x32xf32>
    %cst = arith.constant dense<0.000000e+00> : vector<32x128xf32>
    %8 = tpu.matmul %5, %1, %cst {dimension_numbers = #tpu.dot_dimension_numbers<[1], [0], [0], [1], [0, 0, 1, 1], [], []>} : vector<32x32xf32>, vector<32x128xf32>, vector<32x128xf32> -> vector<32x128xf32>
    %cst_12 = arith.constant dense<0.000000e+00> : vector<32x128xf32>
    %9 = tpu.matmul %7, %3, %cst_12 {dimension_numbers = #tpu.dot_dimension_numbers<[1], [0], [0], [1], [0, 0, 1, 1], [], []>} : vector<32x32xf32>, vector<32x128xf32>, vector<32x128xf32> -> vector<32x128xf32>
    %10 = arith.subf %8, %9 : vector<32x128xf32>
    %c0_13 = arith.constant 0 : index
    %c0_14 = arith.constant 0 : index
    %c0_15 = arith.constant 0 : index
    %11 = vector.load %arg5[%c0_13, %c0_14, %c0_15] : memref<2x32x1xf32, #tpu.memory_space<vmem>>, vector<1x32x1xf32>
    %12 = vector.shape_cast %11 : vector<1x32x1xf32> to vector<32x1xf32>
    %13 = vector.broadcast %12 : vector<32x1xf32> to vector<32x128xf32>
    %14 = arith.addf %10, %13 : vector<32x128xf32>
    %cst_16 = arith.constant 0.000000e+00 : f32
    %15 = vector.broadcast %cst_16 : f32 to vector<32x128xf32>
    %16 = arith.maximumf %14, %15 : vector<32x128xf32>
    %cst_17 = arith.constant dense<0.000000e+00> : vector<32x128xf32>
    %17 = tpu.matmul %5, %3, %cst_17 {dimension_numbers = #tpu.dot_dimension_numbers<[1], [0], [0], [1], [0, 0, 1, 1], [], []>} : vector<32x32xf32>, vector<32x128xf32>, vector<32x128xf32> -> vector<32x128xf32>
    %cst_18 = arith.constant dense<0.000000e+00> : vector<32x128xf32>
    %18 = tpu.matmul %7, %1, %cst_18 {dimension_numbers = #tpu.dot_dimension_numbers<[1], [0], [0], [1], [0, 0, 1, 1], [], []>} : vector<32x32xf32>, vector<32x128xf32>, vector<32x128xf32> -> vector<32x128xf32>
    %19 = arith.addf %17, %18 : vector<32x128xf32>
    %c1_19 = arith.constant 1 : index
    %c0_20 = arith.constant 0 : index
    %c0_21 = arith.constant 0 : index
    %20 = vector.load %arg5[%c1_19, %c0_20, %c0_21] : memref<2x32x1xf32, #tpu.memory_space<vmem>>, vector<1x32x1xf32>
    %21 = vector.shape_cast %20 : vector<1x32x1xf32> to vector<32x1xf32>
    %22 = vector.broadcast %21 : vector<32x1xf32> to vector<32x128xf32>
    %23 = arith.addf %19, %22 : vector<32x128xf32>
    %cst_22 = arith.constant 0.000000e+00 : f32
    %24 = vector.broadcast %cst_22 : f32 to vector<32x128xf32>
    %25 = arith.maximumf %23, %24 : vector<32x128xf32>
    %c0_23 = arith.constant 0 : index
    %c0_24 = arith.constant 0 : index
    %c0_25 = arith.constant 0 : index
    %26 = vector.load %arg4[%c0_23, %c0_24, %c0_25] : memref<2x32x32xf32, #tpu.memory_space<vmem>>, vector<1x32x32xf32>
    %27 = vector.shape_cast %26 : vector<1x32x32xf32> to vector<32x32xf32>
    %c1_26 = arith.constant 1 : index
    %c0_27 = arith.constant 0 : index
    %c0_28 = arith.constant 0 : index
    %28 = vector.load %arg4[%c1_26, %c0_27, %c0_28] : memref<2x32x32xf32, #tpu.memory_space<vmem>>, vector<1x32x32xf32>
    %29 = vector.shape_cast %28 : vector<1x32x32xf32> to vector<32x32xf32>
    %cst_29 = arith.constant dense<0.000000e+00> : vector<32x128xf32>
    %30 = tpu.matmul %27, %16, %cst_29 {dimension_numbers = #tpu.dot_dimension_numbers<[1], [0], [0], [1], [0, 0, 1, 1], [], []>} : vector<32x32xf32>, vector<32x128xf32>, vector<32x128xf32> -> vector<32x128xf32>
    %cst_30 = arith.constant dense<0.000000e+00> : vector<32x128xf32>
    %31 = tpu.matmul %29, %25, %cst_30 {dimension_numbers = #tpu.dot_dimension_numbers<[1], [0], [0], [1], [0, 0, 1, 1], [], []>} : vector<32x32xf32>, vector<32x128xf32>, vector<32x128xf32> -> vector<32x128xf32>
    %32 = arith.subf %30, %31 : vector<32x128xf32>
    %c0_31 = arith.constant 0 : index
    %c0_32 = arith.constant 0 : index
    %c0_33 = arith.constant 0 : index
    %33 = vector.load %arg6[%c0_31, %c0_32, %c0_33] : memref<2x32x1xf32, #tpu.memory_space<vmem>>, vector<1x32x1xf32>
    %34 = vector.shape_cast %33 : vector<1x32x1xf32> to vector<32x1xf32>
    %35 = vector.broadcast %34 : vector<32x1xf32> to vector<32x128xf32>
    %36 = arith.addf %32, %35 : vector<32x128xf32>
    %cst_34 = arith.constant 0.00999999977 : f32
    %37 = vector.broadcast %cst_34 : f32 to vector<32x128xf32>
    %38 = arith.cmpf ogt, %36, %37 : vector<32x128xf32>
    %cst_35 = arith.constant 0.00999999977 : f32
    %39 = vector.broadcast %cst_35 : f32 to vector<32x128xf32>
    %40 = arith.subf %36, %39 : vector<32x128xf32>
    %cst_36 = arith.constant -0.00999999977 : f32
    %41 = vector.broadcast %cst_36 : f32 to vector<32x128xf32>
    %42 = arith.cmpf olt, %36, %41 : vector<32x128xf32>
    %cst_37 = arith.constant 0.00999999977 : f32
    %43 = vector.broadcast %cst_37 : f32 to vector<32x128xf32>
    %44 = arith.addf %36, %43 : vector<32x128xf32>
    %cst_38 = arith.constant 0.000000e+00 : f32
    %45 = vector.broadcast %cst_38 : f32 to vector<32x128xf32>
    %46 = arith.select %42, %44, %45 : vector<32x128xi1>, vector<32x128xf32>
    %47 = arith.select %38, %40, %46 : vector<32x128xi1>, vector<32x128xf32>
    %c0_39 = arith.constant 0 : index
    %c0_40 = arith.constant 0 : index
    %c0_41 = arith.constant 0 : index
    %c0_42 = arith.constant 0 : index
    %48 = vector.load %arg7[%c0_39, %c0_40, %c0_41, %c0_42] : memref<2x1x32x128xf32, #tpu.memory_space<vmem>>, vector<1x1x32x128xf32>
    %49 = vector.shape_cast %48 : vector<1x1x32x128xf32> to vector<32x128xf32>
    %50 = vector.shape_cast %47 : vector<32x128xf32> to vector<1x1x32x128xf32>
    tpu.vector_store %arg7[%c0_39, %c0_40, %c0_41, %c0_42], %50 {strides = array<i32>} : memref<2x1x32x128xf32, #tpu.memory_space<vmem>>, vector<1x1x32x128xf32>,
    %cst_43 = arith.constant dense<0.000000e+00> : vector<32x128xf32>
    %51 = tpu.matmul %27, %25, %cst_43 {dimension_numbers = #tpu.dot_dimension_numbers<[1], [0], [0], [1], [0, 0, 1, 1], [], []>} : vector<32x32xf32>, vector<32x128xf32>, vector<32x128xf32> -> vector<32x128xf32>
    %cst_44 = arith.constant dense<0.000000e+00> : vector<32x128xf32>
    %52 = tpu.matmul %29, %16, %cst_44 {dimension_numbers = #tpu.dot_dimension_numbers<[1], [0], [0], [1], [0, 0, 1, 1], [], []>} : vector<32x32xf32>, vector<32x128xf32>, vector<32x128xf32> -> vector<32x128xf32>
    %53 = arith.addf %51, %52 : vector<32x128xf32>
    %c1_45 = arith.constant 1 : index
    %c0_46 = arith.constant 0 : index
    %c0_47 = arith.constant 0 : index
    %54 = vector.load %arg6[%c1_45, %c0_46, %c0_47] : memref<2x32x1xf32, #tpu.memory_space<vmem>>, vector<1x32x1xf32>
    %55 = vector.shape_cast %54 : vector<1x32x1xf32> to vector<32x1xf32>
    %56 = vector.broadcast %55 : vector<32x1xf32> to vector<32x128xf32>
    %57 = arith.addf %53, %56 : vector<32x128xf32>
    %cst_48 = arith.constant 0.00999999977 : f32
    %58 = vector.broadcast %cst_48 : f32 to vector<32x128xf32>
    %59 = arith.cmpf ogt, %57, %58 : vector<32x128xf32>
    %cst_49 = arith.constant 0.00999999977 : f32
    %60 = vector.broadcast %cst_49 : f32 to vector<32x128xf32>
    %61 = arith.subf %57, %60 : vector<32x128xf32>
    %cst_50 = arith.constant -0.00999999977 : f32
    %62 = vector.broadcast %cst_50 : f32 to vector<32x128xf32>
    %63 = arith.cmpf olt, %57, %62 : vector<32x128xf32>
    %cst_51 = arith.constant 0.00999999977 : f32
    %64 = vector.broadcast %cst_51 : f32 to vector<32x128xf32>
    %65 = arith.addf %57, %64 : vector<32x128xf32>
    %cst_52 = arith.constant 0.000000e+00 : f32
    %66 = vector.broadcast %cst_52 : f32 to vector<32x128xf32>
    %67 = arith.select %63, %65, %66 : vector<32x128xi1>, vector<32x128xf32>
    %68 = arith.select %59, %61, %67 : vector<32x128xi1>, vector<32x128xf32>
    %c1_53 = arith.constant 1 : index
    %c0_54 = arith.constant 0 : index
    %c0_55 = arith.constant 0 : index
    %c0_56 = arith.constant 0 : index
    %69 = vector.load %arg7[%c1_53, %c0_54, %c0_55, %c0_56] : memref<2x1x32x128xf32, #tpu.memory_space<vmem>>, vector<1x1x32x128xf32>
    %70 = vector.shape_cast %69 : vector<1x1x32x128xf32> to vector<32x128xf32>
    %71 = vector.shape_cast %68 : vector<32x128xf32> to vector<1x1x32x128xf32>
    tpu.vector_store %arg7[%c1_53, %c0_54, %c0_55, %c0_56], %71 {strides = array<i32>} : memref<2x1x32x128xf32, #tpu.memory_space<vmem>>, vector<1x1x32x128xf32>,
    return
  }
  func.func @transform_0(%arg0: i32, %arg1: i32) -> (i32, i32, i32, i32) {
    %c0_i32 = arith.constant 0 : i32
    %c0_i32_0 = arith.constant 0 : i32
    %c0_i32_1 = arith.constant 0 : i32
    return %c0_i32, %arg0, %c0_i32_0, %arg1 : i32, i32, i32, i32
  }
  func.func @transform_1(%arg0: i32, %arg1: i32) -> (i32, i32, i32) {
    %c0_i32 = arith.constant 0 : i32
    %c0_i32_0 = arith.constant 0 : i32
    %c0_i32_1 = arith.constant 0 : i32
    %c0_i32_2 = arith.constant 0 : i32
    return %c0_i32, %c0_i32_0, %c0_i32_1 : i32, i32, i32
  }
  func.func @transform_2(%arg0: i32, %arg1: i32) -> (i32, i32, i32) {
    %c0_i32 = arith.constant 0 : i32
    %c0_i32_0 = arith.constant 0 : i32
    %c0_i32_1 = arith.constant 0 : i32
    %c0_i32_2 = arith.constant 0 : i32
    return %c0_i32, %c0_i32_0, %c0_i32_1 : i32, i32, i32
  }
  func.func @transform_3(%arg0: i32, %arg1: i32) -> (i32, i32, i32) {
    %c0_i32 = arith.constant 0 : i32
    %c0_i32_0 = arith.constant 0 : i32
    %c0_i32_1 = arith.constant 0 : i32
    %c0_i32_2 = arith.constant 0 : i32
    return %c0_i32, %c0_i32_0, %c0_i32_1 : i32, i32, i32
  }
  func.func @transform_4(%arg0: i32, %arg1: i32) -> (i32, i32, i32) {
    %c0_i32 = arith.constant 0 : i32
    %c0_i32_0 = arith.constant 0 : i32
    %c0_i32_1 = arith.constant 0 : i32
    %c0_i32_2 = arith.constant 0 : i32
    return %c0_i32, %c0_i32_0, %c0_i32_1 : i32, i32, i32
  }
  func.func @transform_5(%arg0: i32, %arg1: i32) -> (i32, i32, i32, i32) {
    %c0_i32 = arith.constant 0 : i32
    %c0_i32_0 = arith.constant 0 : i32
    %c0_i32_1 = arith.constant 0 : i32
    return %c0_i32, %arg0, %c0_i32_0, %arg1 : i32, i32, i32, i32
  }
}

</mosaic_0001>

<llo_original>
// kernel: tpu_custom_call.1
$region0: #{tpu_custom_call.1}
  #allocation0 [shape = 'u32[]', space=smem, size = 0x4, offset = 0x4, fixed_abs, tag = 'smem constant byte address 0x4 - core index']
  #allocation1 [shape = 'u32[144,128]{1,0:T(1,128)}', space=vmem, size = 0x12000, scoped, tag = 'internal scratch']
  #allocation9 [shape = 's32[]', space=sflag, size = 0x4, offset = 0, fixed_abs, tag = 'sflag constant byte address 0x0 - dummy sync flag']
  %s0 = inlined_call_operand.vmem [shape: f32[2,2,32,128], index: 0, kind: input, shape index: {}]
  %s1 = inlined_call_operand.hbm [shape: f32[2,32,32], index: 1, kind: input, shape index: {}]
  %s2 = inlined_call_operand.hbm [shape: f32[2,32,32], index: 2, kind: input, shape index: {}]
  %s3 = inlined_call_operand.vmem [shape: f32[2,32,1], index: 3, kind: input, shape index: {}]
  %s4 = inlined_call_operand.vmem [shape: f32[2,32,1], index: 4, kind: input, shape index: {}]
  %s5 = inlined_call_operand.hbm [shape: f32[2,2,32,128], index: 5, kind: output, shape index: {}]
  %s6 = sld [smem:[#allocation0]]
  $region99: #{tpu_custom_call.1} parent=0
    _
  %s8 = ssub.s32 1, %s6
  %s9 = scalar_select 0, %s8, %s6
  $region1: #{tpu_custom_call.1} parent=0
    #allocation2 [shape = 'u8[65536]{0}', space=vmem, size = 0x10000, scoped, tag = 'input window, operand 0']
    #allocation3 [shape = 'u8[32768]{0}', space=vmem, size = 0x8000, scoped, tag = 'input window, operand 1, single buffered']
    #allocation4 [shape = 's32[2]{0}', space=sflag, size = 0x8, scoped, tag = 'scoped memory for tpu_custom_call.1']
    #allocation5 [shape = 's32[2]{0}', space=sflag, size = 0x8, scoped, tag = 'scoped memory for tpu_custom_call.1']
    #allocation6 [shape = 'u8[32768]{0}', space=vmem, size = 0x8000, scoped, tag = 'input window, operand 2, single buffered']
    #allocation7 [shape = 's32[1]{0}', space=sflag, size = 0x4, scoped, tag = 'scoped memory for tpu_custom_call.1']
    #allocation8 [shape = 'u8[65536]{0}', space=vmem, size = 0x10000, scoped, tag = 'output window, operand 0']
    %10 = vsyncpa [#allocation4], 0
    %11 = vsyncpa [#allocation7], 0
    %12 = vsyncpa [#allocation5], 0
    %s13 = scalar_lea.sflag [#allocation5], 1
    %14 = vsyncpa %s13, 0
    loop: start=0, step=1, limit=4
    $region2: #{tpu_custom_call.1} parent=1 // loop_pre_header
      _
    $region3: #{tpu_custom_call.1} parent=1 // loop_header
      %s16 = sphi 0, %s20
      %p17 = scmp.ge.s32.totalorder %s16, 4
      %s23 = sphi 0, %s35
      %s24 = sphi 0, %s31
      %s25 = sphi 0, %s23
      %s26 = sphi 0, %s24
      %s27 = sphi 0, %s25
      %s28 = sphi 0, %s26
      %s40 = sphi 0, %s42
      %s43 = sphi 0, %s40
      %s44 = sphi 0, %s43
      %s60 = sphi 0, %s44
      %s64 = sphi 0, %s64
      %s66 = sphi 0, %s64
      %s67 = sphi 0, %s66
      %s81 = sphi 0, %s67
      %s85 = sphi 0, %s85
      %s87 = sphi 0, %s85
      %s88 = sphi 0, %s87
      %s102 = sphi 0, %s88
      %s106 = sphi 0, %s106
      %s108 = sphi 0, %s106
      %s109 = sphi 0, %s108
      %s123 = sphi 0, %s109
      %s127 = sphi 0, %s127
      %s129 = sphi 0, %s127
      %s130 = sphi 0, %s129
      %s144 = sphi 0, %s130
      %s152 = sphi 0, %s154
      %s155 = sphi 0, %s152
      %s156 = sphi 0, %s155
      %s172 = sphi 0, %s156
    $region4: #{tpu_custom_call.1} parent=1 // loop_header_branch
      %19 = sbr.rel (%p17) target = $region8
    $region5: #{tpu_custom_call.1} parent=1 // loop_body
      %s21 = ssub.s32 %s16, 1
      %s22 = ssub.s32 %s16, 2
      %s29 = sadd.s32 1, %s24
      %p30 = scmp.ge.s32.totalorder %s29, 1
      %s31 = scalar_select %p30, 0, %s29
      %s32 = sadd.s32 1, %s23
      %s33 = scalar_select %p30, %s32, %s23
      %p34 = scmp.ge.s32.totalorder %s33, 2
      %s35 = scalar_select %p34, 0, %s33
      %s36 = ssub.s32 %s23, %s35
      %s37 = ssub.s32 %s24, %s31
      %s38 = sor.u32 %s36, %s37
      %p39 = scmp.eq.s32.totalorder %s38, 0
      %s41 = sadd.s32 %s40, 1
      %s42 = scalar_select %p39, %s40, %s41
      %p45 = pneg %p39
      %p46 = scmp.eq.s32.totalorder %s16, 1
      %p47 = por %p45, %p46
      %p48 = scmp.ne.s32.totalorder %s40, %s43
      %p49 = scmp.eq.s32.totalorder %s16, 0
      %p50 = por %p48, %p49
      %p51 = scmp.ne.s32.totalorder %s40, %s43
      %p52 = scmp.eq.s32.totalorder %s21, 1
      %p53 = por %p51, %p52
      %p54 = scmp.ne.s32.totalorder %s43, %s44
      %p55 = scmp.eq.s32.totalorder %s21, 0
      %p56 = por %p54, %p55
      %p57 = scmp.ne.s32.totalorder %s43, %s44
      %p58 = scmp.eq.s32.totalorder %s22, 1
      %p59 = por %p57, %p58
      %p61 = scmp.ne.s32.totalorder %s44, %s60
      %p62 = scmp.eq.s32.totalorder %s22, 0
      %p63 = por %p61, %p62
      %s65 = sadd.s32 %s64, 1
      %p68 = scmp.eq.s32.totalorder %s16, 1
      %p69 = scmp.ne.s32.totalorder %s64, %s66
      %p70 = scmp.eq.s32.totalorder %s16, 0
      %p71 = por %p69, %p70
      %p72 = scmp.ne.s32.totalorder %s64, %s66
      %p73 = scmp.eq.s32.totalorder %s21, 1
      %p74 = por %p72, %p73
      %p75 = scmp.ne.s32.totalorder %s66, %s67
      %p76 = scmp.eq.s32.totalorder %s21, 0
      %p77 = por %p75, %p76
      %p78 = scmp.ne.s32.totalorder %s66, %s67
      %p79 = scmp.eq.s32.totalorder %s22, 1
      %p80 = por %p78, %p79
      %p82 = scmp.ne.s32.totalorder %s67, %s81
      %p83 = scmp.eq.s32.totalorder %s22, 0
      %p84 = por %p82, %p83
      %s86 = sadd.s32 %s85, 1
      %p89 = scmp.eq.s32.totalorder %s16, 1
      %p90 = scmp.ne.s32.totalorder %s85, %s87
      %p91 = scmp.eq.s32.totalorder %s16, 0
      %p92 = por %p90, %p91
      %p93 = scmp.ne.s32.totalorder %s85, %s87
      %p94 = scmp.eq.s32.totalorder %s21, 1
      %p95 = por %p93, %p94
      %p96 = scmp.ne.s32.totalorder %s87, %s88
      %p97 = scmp.eq.s32.totalorder %s21, 0
      %p98 = por %p96, %p97
      %p99 = scmp.ne.s32.totalorder %s87, %s88
      %p100 = scmp.eq.s32.totalorder %s22, 1
      %p101 = por %p99, %p100
      %p103 = scmp.ne.s32.totalorder %s88, %s102
      %p104 = scmp.eq.s32.totalorder %s22, 0
      %p105 = por %p103, %p104
      %s107 = sadd.s32 %s106, 1
      %p110 = scmp.eq.s32.totalorder %s16, 1
      %p111 = scmp.ne.s32.totalorder %s106, %s108
      %p112 = scmp.eq.s32.totalorder %s16, 0
      %p113 = por %p111, %p112
      %p114 = scmp.ne.s32.totalorder %s106, %s108
      %p115 = scmp.eq.s32.totalorder %s21, 1
      %p116 = por %p114, %p115
      %p117 = scmp.ne.s32.totalorder %s108, %s109
      %p118 = scmp.eq.s32.totalorder %s21, 0
      %p119 = por %p117, %p118
      %p120 = scmp.ne.s32.totalorder %s108, %s109
      %p121 = scmp.eq.s32.totalorder %s22, 1
      %p122 = por %p120, %p121
      %p124 = scmp.ne.s32.totalorder %s109, %s123
      %p125 = scmp.eq.s32.totalorder %s22, 0
      %p126 = por %p124, %p125
      %s128 = sadd.s32 %s127, 1
      %p131 = scmp.eq.s32.totalorder %s16, 1
      %p132 = scmp.ne.s32.totalorder %s127, %s129
      %p133 = scmp.eq.s32.totalorder %s16, 0
      %p134 = por %p132, %p133
      %p135 = scmp.ne.s32.totalorder %s127, %s129
      %p136 = scmp.eq.s32.totalorder %s21, 1
      %p137 = por %p135, %p136
      %p138 = scmp.ne.s32.totalorder %s129, %s130
      %p139 = scmp.eq.s32.totalorder %s21, 0
      %p140 = por %p138, %p139
      %p141 = scmp.ne.s32.totalorder %s129, %s130
      %p142 = scmp.eq.s32.totalorder %s22, 1
      %p143 = por %p141, %p142
      %p145 = scmp.ne.s32.totalorder %s130, %s144
      %p146 = scmp.eq.s32.totalorder %s22, 0
      %p147 = por %p145, %p146
      %s148 = ssub.s32 %s23, %s35
      %s149 = ssub.s32 %s24, %s31
      %s150 = sor.u32 %s148, %s149
      %p151 = scmp.eq.s32.totalorder %s150, 0
      %s153 = sadd.s32 %s152, 1
      %s154 = scalar_select %p151, %s152, %s153
      %p157 = pneg %p151
      %p158 = scmp.eq.s32.totalorder %s16, 1
      %p159 = por %p157, %p158
      %p160 = scmp.ne.s32.totalorder %s152, %s155
      %p161 = scmp.eq.s32.totalorder %s16, 0
      %p162 = por %p160, %p161
      %p163 = scmp.ne.s32.totalorder %s152, %s155
      %p164 = scmp.eq.s32.totalorder %s21, 1
      %p165 = por %p163, %p164
      %p166 = scmp.ne.s32.totalorder %s155, %s156
      %p167 = scmp.eq.s32.totalorder %s21, 0
      %p168 = por %p166, %p167
      %p169 = scmp.ne.s32.totalorder %s155, %s156
      %p170 = scmp.eq.s32.totalorder %s22, 1
      %p171 = por %p169, %p170
      %p173 = scmp.ne.s32.totalorder %s156, %s172
      %p174 = scmp.eq.s32.totalorder %s22, 0
      %p175 = por %p173, %p174
      %p176 = scmp.le.s32.totalorder 1, %s16
      %p177 = scmp.lt.s32.totalorder %s16, 3
      %p178 = pnand %p176, %p177
      %p179 = pneg %p178
      // Predicated region
      $region9: #{tpu_custom_call.1} parent=5 // pred_check
        _
      $region10: #{tpu_custom_call.1} parent=5 // pred_check_branch
        %181 = sbr.rel (%p178) target = $region12
      $region11: #{tpu_custom_call.1} parent=5 // pred_region
        %s182 = ssub.s32 %s16, 1
        // Predicated region
        $region13: #{tpu_custom_call.1} parent=11 // pred_check
          %p183 = pneg %p77
        $region14: #{tpu_custom_call.1} parent=11 // pred_check_branch
          %185 = sbr.rel (%p183) target = $region16
        $region15: #{tpu_custom_call.1} parent=11 // pred_region
          %s187 = ssub.s32 1024, 1024
          %188 = vsyncadd [#allocation4], %s187
          %s189 = sshll.u32 [#allocation3], 4
          %s190 = int_to_ptr.vmem [resolvable:$true] %s189
          %195 = dma.hbm_to_vmem [thread:$0]  %s1, 1024, %s190, [#allocation4], 128, 128, 8
        $region16: #{tpu_custom_call.1} parent=11 // pred_fallthru
          _
        // Predicated region
        $region17: #{tpu_custom_call.1} parent=11 // pred_check
          %p196 = pneg %p98
        $region18: #{tpu_custom_call.1} parent=11 // pred_check_branch
          %198 = sbr.rel (%p196) target = $region20
        $region19: #{tpu_custom_call.1} parent=11 // pred_region
          %s200 = ssub.s32 1024, 1024
          %201 = vsyncadd [#allocation7], %s200
          %s202 = sshll.u32 [#allocation6], 4
          %s203 = int_to_ptr.vmem [resolvable:$true] %s202
          %208 = dma.hbm_to_vmem [thread:$0]  %s2, 1024, %s203, [#allocation7], 128, 128, 8
        $region20: #{tpu_custom_call.1} parent=11 // pred_fallthru
          _
        // Predicated region
        $region21: #{tpu_custom_call.1} parent=11 // pred_check
          %p209 = pneg %p119
        $region22: #{tpu_custom_call.1} parent=11 // pred_check_branch
          %211 = sbr.rel (%p209) target = $region24
        $region23: #{tpu_custom_call.1} parent=11 // pred_region
          _
        $region24: #{tpu_custom_call.1} parent=11 // pred_fallthru
          _
        // Predicated region
        $region25: #{tpu_custom_call.1} parent=11 // pred_check
          %p212 = pneg %p140
        $region26: #{tpu_custom_call.1} parent=11 // pred_check_branch
          %214 = sbr.rel (%p212) target = $region28
        $region27: #{tpu_custom_call.1} parent=11 // pred_region
          _
        $region28: #{tpu_custom_call.1} parent=11 // pred_fallthru
          _
      $region12: #{tpu_custom_call.1} parent=5 // pred_fallthru
        _
      %p215 = scmp.lt.s32.totalorder %s16, 2
      // Predicated region
      $region29: #{tpu_custom_call.1} parent=5 // pred_check
        %p216 = pneg %p215
      $region30: #{tpu_custom_call.1} parent=5 // pred_check_branch
        %218 = sbr.rel (%p216) target = $region32
      $region31: #{tpu_custom_call.1} parent=5 // pred_region
        // Predicated region
        $region33: #{tpu_custom_call.1} parent=31 // pred_check
          %p219 = pneg %p50
        $region34: #{tpu_custom_call.1} parent=31 // pred_check_branch
          %221 = sbr.rel (%p219) target = $region36
        $region35: #{tpu_custom_call.1} parent=31 // pred_region
          %s222 = sand.u32 %s40, 1
          %s223 = sand.u32 %s40, 1
          %s224 = smul.addr %s223, 64
          %s225 = scalar_lea.vmem [#allocation2], %s224
          %s226 = smul.addr %s23, 4
          %s227 = sadd.s32 %s24, %s226
          %s228 = smul.addr %s227, 8
          %s229 = scalar_lea.vmem %s0, %s228
          // Predicated region
          $region37: #{tpu_custom_call.1} parent=35 // pred_check
            _
          $region38: #{tpu_custom_call.1} parent=35 // pred_check_branch
            %231 = sbr.rel (0) target = $region40
          $region39: #{tpu_custom_call.1} parent=35 // pred_region
            // Predicated region
            $region41: #{tpu_custom_call.1} parent=39 // pred_check
              _
            $region42: #{tpu_custom_call.1} parent=39 // pred_check_branch
              %233 = sbr.rel (0) target = $region44
            $region43: #{tpu_custom_call.1} parent=39 // pred_region
              // Predicated region
              $region56: #{tpu_custom_call.1} parent=43 // pred_check
                _
              $region57: #{tpu_custom_call.1} parent=43 // pred_check_branch
                %262 = sbr.rel (0) target = $region59
              $region58: #{tpu_custom_call.1} parent=43 // pred_region
                loop: start=0, step=1, limit=1
                $region60: #{tpu_custom_call.1} parent=58 // loop_pre_header
                  _
                $region61: #{tpu_custom_call.1} parent=58 // loop_header
                  %s264 = sphi 0, %s268
                  %p265 = scmp.ge.s32.totalorder %s264, 1
                  %s269 = sphi %s229, %s229
                  %s270 = sphi %s225, %s225
                $region62: #{tpu_custom_call.1} parent=58 // loop_header_branch
                  %267 = sbr.rel (%p265) target = $region66
                $region63: #{tpu_custom_call.1} parent=58 // loop_body
                  %v271 = vld [vmem:[%s269] sm:$0xff]
                  %272 = vst [vmem:[%s270] sm:$0xff] %v271
                  %v273 = vld [vmem:[%s269 + $0x8] sm:$0xff]
                  %274 = vst [vmem:[%s270 + $0x8] sm:$0xff] %v273
                  %v275 = vld [vmem:[%s269 + $0x10] sm:$0xff]
                  %276 = vst [vmem:[%s270 + $0x10] sm:$0xff] %v275
                  %v277 = vld [vmem:[%s269 + $0x18] sm:$0xff]
                  %278 = vst [vmem:[%s270 + $0x18] sm:$0xff] %v277
                  %v279 = vld [vmem:[%s269 + $0x40] sm:$0xff]
                  %280 = vst [vmem:[%s270 + $0x20] sm:$0xff] %v279
                  %v281 = vld [vmem:[%s269 + $0x48] sm:$0xff]
                  %282 = vst [vmem:[%s270 + $0x28] sm:$0xff] %v281
                  %v283 = vld [vmem:[%s269 + $0x50] sm:$0xff]
                  %284 = vst [vmem:[%s270 + $0x30] sm:$0xff] %v283
                  %v285 = vld [vmem:[%s269 + $0x58] sm:$0xff]
                  %286 = vst [vmem:[%s270 + $0x38] sm:$0xff] %v285
                $region64: #{tpu_custom_call.1} parent=58 // loop_footer
                  %s268 = sadd.s32 1, %s264
                $region65: #{tpu_custom_call.1} parent=58 // loop_footer_branch
                  %263 = sbr.rel target = $region61
                $region66: #{tpu_custom_call.1} parent=58 // loop_exit
                  _
              $region59: #{tpu_custom_call.1} parent=43 // pred_fallthru
                _
              // Predicated region
              $region67: #{tpu_custom_call.1} parent=43 // pred_check
                _
              $region68: #{tpu_custom_call.1} parent=43 // pred_check_branch
                %288 = sbr.rel target = $region70
              $region69: #{tpu_custom_call.1} parent=43 // pred_region
                _
              $region70: #{tpu_custom_call.1} parent=43 // pred_fallthru
                _
            $region44: #{tpu_custom_call.1} parent=39 // pred_fallthru
              _
            // Predicated region
            $region45: #{tpu_custom_call.1} parent=39 // pred_check
              _
            $region46: #{tpu_custom_call.1} parent=39 // pred_check_branch
              %235 = sbr.rel target = $region48
            $region47: #{tpu_custom_call.1} parent=39 // pred_region
              loop: start=0, step=1, limit=1
              $region49: #{tpu_custom_call.1} parent=47 // loop_pre_header
                _
              $region50: #{tpu_custom_call.1} parent=47 // loop_header
                %s238 = sphi 0, %s242
                %p239 = scmp.ge.s32.totalorder %s238, 1
                %s243 = sphi %s229, %s229
                %s244 = sphi %s225, %s225
              $region51: #{tpu_custom_call.1} parent=47 // loop_header_branch
                %241 = sbr.rel (%p239) target = $region55
              $region52: #{tpu_custom_call.1} parent=47 // loop_body
                %v245 = vld [vmem:[%s243] sm:$0xff]
                %246 = vst [vmem:[%s244] sm:$0xff] %v245
                %v247 = vld [vmem:[%s243 + $0x8] sm:$0xff]
                %248 = vst [vmem:[%s244 + $0x8] sm:$0xff] %v247
                %v249 = vld [vmem:[%s243 + $0x10] sm:$0xff]
                %250 = vst [vmem:[%s244 + $0x10] sm:$0xff] %v249
                %v251 = vld [vmem:[%s243 + $0x18] sm:$0xff]
                %252 = vst [vmem:[%s244 + $0x18] sm:$0xff] %v251
                %v253 = vld [vmem:[%s243 + $0x40] sm:$0xff]
                %254 = vst [vmem:[%s244 + $0x20] sm:$0xff] %v253
                %v255 = vld [vmem:[%s243 + $0x48] sm:$0xff]
                %256 = vst [vmem:[%s244 + $0x28] sm:$0xff] %v255
                %v257 = vld [vmem:[%s243 + $0x50] sm:$0xff]
                %258 = vst [vmem:[%s244 + $0x30] sm:$0xff] %v257
                %v259 = vld [vmem:[%s243 + $0x58] sm:$0xff]
                %260 = vst [vmem:[%s244 + $0x38] sm:$0xff] %v259
              $region53: #{tpu_custom_call.1} parent=47 // loop_footer
                %s242 = sadd.s32 1, %s238
              $region54: #{tpu_custom_call.1} parent=47 // loop_footer_branch
                %237 = sbr.rel target = $region50
              $region55: #{tpu_custom_call.1} parent=47 // loop_exit
                _
            $region48: #{tpu_custom_call.1} parent=39 // pred_fallthru
              _
          $region40: #{tpu_custom_call.1} parent=35 // pred_fallthru
            _
          %289 = vnop
        $region36: #{tpu_custom_call.1} parent=31 // pred_fallthru
          _
      $region32: #{tpu_custom_call.1} parent=5 // pred_fallthru
        _
      %p290 = scmp.le.s32.totalorder 1, %s16
      %p291 = scmp.lt.s32.totalorder %s16, 3
      %p292 = pnand %p290, %p291
      %p293 = pneg %p292
      // Predicated region
      $region71: #{tpu_custom_call.1} parent=5 // pred_check
        _
      $region72: #{tpu_custom_call.1} parent=5 // pred_check_branch
        %295 = sbr.rel (%p292) target = $region74
      $region73: #{tpu_custom_call.1} parent=5 // pred_region
        %s296 = ssub.s32 %s16, 1
        %s297 = sand.u32 %s43, 1
        %s298 = sand.u32 %s43, 1
        %s299 = smul.addr %s298, 64
        %s300 = scalar_lea.vmem [#allocation2], %s299
        // Predicated region
        $region75: #{tpu_custom_call.1} parent=73 // pred_check
          %p301 = pneg %p56
        $region76: #{tpu_custom_call.1} parent=73 // pred_check_branch
          %303 = sbr.rel (%p301) target = $region78
        $region77: #{tpu_custom_call.1} parent=73 // pred_region
          _
        $region78: #{tpu_custom_call.1} parent=73 // pred_fallthru
          _
        // Predicated region
        $region79: #{tpu_custom_call.1} parent=73 // pred_check
          %p304 = pneg %p77
        $region80: #{tpu_custom_call.1} parent=73 // pred_check_branch
          %306 = sbr.rel (%p304) target = $region82
        $region81: #{tpu_custom_call.1} parent=73 // pred_region
          %307 = dma.done [#allocation4], 1024
        $region82: #{tpu_custom_call.1} parent=73 // pred_fallthru
          _
        // Predicated region
        $region83: #{tpu_custom_call.1} parent=73 // pred_check
          %p308 = pneg %p98
        $region84: #{tpu_custom_call.1} parent=73 // pred_check_branch
          %310 = sbr.rel (%p308) target = $region86
        $region85: #{tpu_custom_call.1} parent=73 // pred_region
          %311 = dma.done [#allocation7], 1024
        $region86: #{tpu_custom_call.1} parent=73 // pred_fallthru
          _
        %s312 = sand.u32 %s43, 1
        %s313 = sand.u32 %s43, 1
        %s314 = smul.addr %s313, 64
        %s315 = scalar_lea.vmem [#allocation2], %s314
        %p316 = pneg %p56
        %p317 = pneg %p53
        %p318 = pneg %p77
        %p319 = pneg %p74
        %p320 = pneg %p98
        %p321 = pneg %p95
        %p322 = pneg %p119
        %p323 = pneg %p116
        %p324 = pneg %p140
        %p325 = pneg %p137
        %p326 = pneg %p168
        %p327 = pneg %p165
        %s328 = sand.u32 %s155, 1
        %s329 = scalar_lea.sflag [#allocation5], %s328
        %s330 = sand.u32 %s155, 1
        %s331 = smul.addr %s330, 64
        %s332 = scalar_lea.vmem [#allocation8], %s331
        %v333 = vld [vmem:[%s300] sm:$0xff]
        %v334 = vld [vmem:[%s300 + $0x8] sm:$0xff]
        %v335 = vld [vmem:[%s300 + $0x10] sm:$0xff]
        %v336 = vld [vmem:[%s300 + $0x18] sm:$0xff]
        %s337 = scalar_lea.vmem %s300, 32 [#allocation2]
        %v338 = vld [vmem:[%s337] sm:$0xff]
        %v339 = vld [vmem:[%s337 + $0x8] sm:$0xff]
        %v340 = vld [vmem:[%s337 + $0x10] sm:$0xff]
        %v341 = vld [vmem:[%s337 + $0x18] sm:$0xff]
        %v342 = vld [vmem:[#allocation3] sm:$0xff]
        %v343 = vld [vmem:[#allocation3 + $0x8] sm:$0xff]
        %v344 = vld [vmem:[#allocation3 + $0x10] sm:$0xff]
        %v345 = vld [vmem:[#allocation3 + $0x18] sm:$0xff]
        %s346 = scalar_lea.vmem [#allocation3], 32
        %v347 = vld [vmem:[%s346] sm:$0xff]
        %v348 = vld [vmem:[%s346 + $0x8] sm:$0xff]
        %v349 = vld [vmem:[%s346 + $0x10] sm:$0xff]
        %v350 = vld [vmem:[%s346 + $0x18] sm:$0xff]
        %vm351 = vcmask 261120
        %v353 = vsel %vm351, %v342, 0
        %v356 = vsel %vm351, %v343, 0
        %v359 = vsel %vm351, %v344, 0
        %v362 = vsel %vm351, %v345, 0
        %364 = vmatprep.subr.mxu0 0.0
        %365 = vmatpush1.msra.mxu0 %v333
        %366 = vmatprep.subr.mxu0 0.0
        %367 = vmatpush1.msra.mxu0 %v334
        %368 = vmatprep.subr.mxu0 0.0
        %369 = vmatpush1.msra.mxu0 %v335
        %370 = vmatprep.subr.mxu0 0.0
        %371 = vmatpush1.msra.mxu0 %v336
        %372 = vmatprep.subr.mxu0 0.0
        %373 = vmatpush1.msra.mxu0 0.0
        %374 = vmatprep.subr.mxu0 0.0
        %375 = vmatpush1.msra.mxu0 0.0
        %376 = vmatprep.subr.mxu0 0.0
        %377 = vmatpush1.msra.mxu0 0.0
        %378 = vmatprep.subr.mxu0 0.0
        %379 = vmatpush1.msra.mxu0 0.0
        %380 = vmatprep.subr.mxu0 0.0
        %381 = vmatpush1.msra.mxu0 0.0
        %382 = vmatprep.subr.mxu0 0.0
        %383 = vmatpush1.msra.mxu0 0.0
        %384 = vmatprep.subr.mxu0 0.0
        %385 = vmatpush1.msra.mxu0 0.0
        %386 = vmatprep.subr.mxu0 0.0
        %387 = vmatpush1.msra.mxu0 0.0
        %388 = vmatprep.subr.mxu0 0.0
        %389 = vmatpush1.msra.mxu0 0.0
        %390 = vmatprep.subr.mxu0 0.0
        %391 = vmatpush1.msra.mxu0 0.0
        %392 = vmatprep.subr.mxu0 0.0
        %393 = vmatpush1.msra.mxu0 0.0
        %394 = vmatprep.subr.mxu0 0.0
        %395 = vmatpush1.msra.mxu0 0.0
        %396 = vmatprep.subr.mxu0 0.0
        %397 = vmatpush1.msra.mxu0 0.0
        %398 = vmatprep.subr.mxu0 0.0
        %399 = vmatpush1.msra.mxu0 0.0
        %400 = vmatprep.subr.mxu0 0.0
        %401 = vmatpush1.msra.mxu0 0.0
        %402 = vmatprep.subr.mxu0 0.0
        %403 = vmatpush1.msra.mxu0 0.0
        %404 = vmatprep.subr.mxu0 0.0
        %405 = vmatpush1.msra.mxu0 0.0
        %406 = vmatprep.subr.mxu0 0.0
        %407 = vmatpush1.msra.mxu0 0.0
        %408 = vmatprep.subr.mxu0 0.0
        %409 = vmatpush1.msra.mxu0 0.0
        %410 = vmatprep.subr.mxu0 0.0
        %411 = vmatpush1.msra.mxu0 0.0
        %412 = vmatprep.subr.mxu0 0.0
        %413 = vmatpush1.msra.mxu0 0.0
        %414 = vmatprep.subr.mxu0 0.0
        %415 = vmatpush1.msra.mxu0 0.0
        %416 = vmatprep.subr.mxu0 0.0
        %417 = vmatpush1.msra.mxu0 0.0
        %418 = vmatprep.subr.mxu0 0.0
        %419 = vmatpush1.msra.mxu0 0.0
        %420 = vmatprep.subr.mxu0 0.0
        %421 = vmatpush1.msra.mxu0 0.0
        %422 = vmatprep.subr.mxu0 0.0
        %423 = vmatpush1.msra.mxu0 0.0
        %424 = vmatprep.subr.mxu0 0.0
        %425 = vmatpush1.msra.mxu0 0.0
        %426 = vmatprep.subr.mxu0 0.0
        %427 = vmatpush1.msra.mxu0 0.0
        %428 = vmatprep.mubr.f32.mxu0 0.0
        %429 = vmatmul.mubr.f32.gmra.mrb[0].mxu0 %v353
        %v430 = vpop.f32.mrb[0].mxu0
        %v431 = vadd.f32 0.0, %v430
        %v432 = vpop.f32.mrb[0].mxu0
        %433 = vmatprep.mubr.f32.mxu0 0.0
        %434 = vmatmul.mubr.f32.gmra.mrb[0].mxu0 %v356
        %v435 = vpop.f32.mrb[0].mxu0
        %v436 = vadd.f32 0.0, %v435
        %v437 = vpop.f32.mrb[0].mxu0
        %438 = vmatprep.mubr.f32.mxu0 0.0
        %439 = vmatmul.mubr.f32.gmra.mrb[0].mxu0 %v359
        %v440 = vpop.f32.mrb[0].mxu0
        %v441 = vadd.f32 0.0, %v440
        %v442 = vpop.f32.mrb[0].mxu0
        %443 = vmatprep.mubr.f32.mxu0 0.0
        %444 = vmatmul.mubr.f32.gmra.mrb[0].mxu0 %v362
        %v445 = vpop.f32.mrb[0].mxu0
        %v446 = vadd.f32 0.0, %v445
        %v447 = vpop.f32.mrb[0].mxu0
        %448 = vdwg.mxu0
        %v450 = vsel %vm351, %v347, 0
        %v453 = vsel %vm351, %v348, 0
        %v456 = vsel %vm351, %v349, 0
        %v459 = vsel %vm351, %v350, 0
        %461 = vmatprep.subr.mxu0 0.0
        %462 = vmatpush1.msra.mxu0 %v338
        %463 = vmatprep.subr.mxu0 0.0
        %464 = vmatpush1.msra.mxu0 %v339
        %465 = vmatprep.subr.mxu0 0.0
        %466 = vmatpush1.msra.mxu0 %v340
        %467 = vmatprep.subr.mxu0 0.0
        %468 = vmatpush1.msra.mxu0 %v341
        %469 = vmatprep.subr.mxu0 0.0
        %470 = vmatpush1.msra.mxu0 0.0
        %471 = vmatprep.subr.mxu0 0.0
        %472 = vmatpush1.msra.mxu0 0.0
        %473 = vmatprep.subr.mxu0 0.0
        %474 = vmatpush1.msra.mxu0 0.0
        %475 = vmatprep.subr.mxu0 0.0
        %476 = vmatpush1.msra.mxu0 0.0
        %477 = vmatprep.subr.mxu0 0.0
        %478 = vmatpush1.msra.mxu0 0.0
        %479 = vmatprep.subr.mxu0 0.0
        %480 = vmatpush1.msra.mxu0 0.0
        %481 = vmatprep.subr.mxu0 0.0
        %482 = vmatpush1.msra.mxu0 0.0
        %483 = vmatprep.subr.mxu0 0.0
        %484 = vmatpush1.msra.mxu0 0.0
        %485 = vmatprep.subr.mxu0 0.0
        %486 = vmatpush1.msra.mxu0 0.0
        %487 = vmatprep.subr.mxu0 0.0
        %488 = vmatpush1.msra.mxu0 0.0
        %489 = vmatprep.subr.mxu0 0.0
        %490 = vmatpush1.msra.mxu0 0.0
        %491 = vmatprep.subr.mxu0 0.0
        %492 = vmatpush1.msra.mxu0 0.0
        %493 = vmatprep.subr.mxu0 0.0
        %494 = vmatpush1.msra.mxu0 0.0
        %495 = vmatprep.subr.mxu0 0.0
        %496 = vmatpush1.msra.mxu0 0.0
        %497 = vmatprep.subr.mxu0 0.0
        %498 = vmatpush1.msra.mxu0 0.0
        %499 = vmatprep.subr.mxu0 0.0
        %500 = vmatpush1.msra.mxu0 0.0
        %501 = vmatprep.subr.mxu0 0.0
        %502 = vmatpush1.msra.mxu0 0.0
        %503 = vmatprep.subr.mxu0 0.0
        %504 = vmatpush1.msra.mxu0 0.0
        %505 = vmatprep.subr.mxu0 0.0
        %506 = vmatpush1.msra.mxu0 0.0
        %507 = vmatprep.subr.mxu0 0.0
        %508 = vmatpush1.msra.mxu0 0.0
        %509 = vmatprep.subr.mxu0 0.0
        %510 = vmatpush1.msra.mxu0 0.0
        %511 = vmatprep.subr.mxu0 0.0
        %512 = vmatpush1.msra.mxu0 0.0
        %513 = vmatprep.subr.mxu0 0.0
        %514 = vmatpush1.msra.mxu0 0.0
        %515 = vmatprep.subr.mxu0 0.0
        %516 = vmatpush1.msra.mxu0 0.0
        %517 = vmatprep.subr.mxu0 0.0
        %518 = vmatpush1.msra.mxu0 0.0
        %519 = vmatprep.subr.mxu0 0.0
        %520 = vmatpush1.msra.mxu0 0.0
        %521 = vmatprep.subr.mxu0 0.0
        %522 = vmatpush1.msra.mxu0 0.0
        %523 = vmatprep.subr.mxu0 0.0
        %524 = vmatpush1.msra.mxu0 0.0
        %525 = vmatprep.mubr.f32.mxu0 0.0
        %526 = vmatmul.mubr.f32.gmra.mrb[0].mxu0 %v450
        %v527 = vpop.f32.mrb[0].mxu0
        %v528 = vadd.f32 0.0, %v527
        %v529 = vpop.f32.mrb[0].mxu0
        %530 = vmatprep.mubr.f32.mxu0 0.0
        %531 = vmatmul.mubr.f32.gmra.mrb[0].mxu0 %v453
        %v532 = vpop.f32.mrb[0].mxu0
        %v533 = vadd.f32 0.0, %v532
        %v534 = vpop.f32.mrb[0].mxu0
        %535 = vmatprep.mubr.f32.mxu0 0.0
        %536 = vmatmul.mubr.f32.gmra.mrb[0].mxu0 %v456
        %v537 = vpop.f32.mrb[0].mxu0
        %v538 = vadd.f32 0.0, %v537
        %v539 = vpop.f32.mrb[0].mxu0
        %540 = vmatprep.mubr.f32.mxu0 0.0
        %541 = vmatmul.mubr.f32.gmra.mrb[0].mxu0 %v459
        %v542 = vpop.f32.mrb[0].mxu0
        %v543 = vadd.f32 0.0, %v542
        %v544 = vpop.f32.mrb[0].mxu0
        %545 = vdwg.mxu0
        %v546 = vsub.f32 %v431, %v528
        %v547 = vsub.f32 %v436, %v533
        %v548 = vsub.f32 %v441, %v538
        %v549 = vsub.f32 %v446, %v543
        %v550 = vld [vmem:[%s3] sm:$0xff]
        %v551 = vld [vmem:[%s3 + $0x8] sm:$0xff]
        %v552 = vld [vmem:[%s3 + $0x10] sm:$0xff]
        %v553 = vld [vmem:[%s3 + $0x18] sm:$0xff]
        %555 = vset.pattern.permute.xlu0 0
        %556 = vperm.xlu0 %555, %v550
        %v557 = vpop.permute.xlu0 %556
        %560 = vset.pattern.permute.xlu0 0
        %561 = vperm.xlu0 %560, %v551
        %v562 = vpop.permute.xlu0 %561
        %565 = vset.pattern.permute.xlu0 0
        %566 = vperm.xlu0 %565, %v552
        %v567 = vpop.permute.xlu0 %566
        %570 = vset.pattern.permute.xlu0 0
        %571 = vperm.xlu0 %570, %v553
        %v572 = vpop.permute.xlu0 %571
        %v574 = vadd.f32 %v546, %v557
        %v575 = vadd.f32 %v547, %v562
        %v576 = vadd.f32 %v548, %v567
        %v577 = vadd.f32 %v549, %v572
        %v578 = vmax.f32 %v574, 0.0
        %v579 = vmax.f32 %v575, 0.0
        %v580 = vmax.f32 %v576, 0.0
        %v581 = vmax.f32 %v577, 0.0
        %582 = vmatprep.subr.mxu0 0.0
        %583 = vmatpush1.msra.mxu0 %v333
        %584 = vmatprep.subr.mxu0 0.0
        %585 = vmatpush1.msra.mxu0 %v334
        %586 = vmatprep.subr.mxu0 0.0
        %587 = vmatpush1.msra.mxu0 %v335
        %588 = vmatprep.subr.mxu0 0.0
        %589 = vmatpush1.msra.mxu0 %v336
        %590 = vmatprep.subr.mxu0 0.0
        %591 = vmatpush1.msra.mxu0 0.0
        %592 = vmatprep.subr.mxu0 0.0
        %593 = vmatpush1.msra.mxu0 0.0
        %594 = vmatprep.subr.mxu0 0.0
        %595 = vmatpush1.msra.mxu0 0.0
        %596 = vmatprep.subr.mxu0 0.0
        %597 = vmatpush1.msra.mxu0 0.0
        %598 = vmatprep.subr.mxu0 0.0
        %599 = vmatpush1.msra.mxu0 0.0
        %600 = vmatprep.subr.mxu0 0.0
        %601 = vmatpush1.msra.mxu0 0.0
        %602 = vmatprep.subr.mxu0 0.0
        %603 = vmatpush1.msra.mxu0 0.0
        %604 = vmatprep.subr.mxu0 0.0
        %605 = vmatpush1.msra.mxu0 0.0
        %606 = vmatprep.subr.mxu0 0.0
        %607 = vmatpush1.msra.mxu0 0.0
        %608 = vmatprep.subr.mxu0 0.0
        %609 = vmatpush1.msra.mxu0 0.0
        %610 = vmatprep.subr.mxu0 0.0
        %611 = vmatpush1.msra.mxu0 0.0
        %612 = vmatprep.subr.mxu0 0.0
        %613 = vmatpush1.msra.mxu0 0.0
        %614 = vmatprep.subr.mxu0 0.0
        %615 = vmatpush1.msra.mxu0 0.0
        %616 = vmatprep.subr.mxu0 0.0
        %617 = vmatpush1.msra.mxu0 0.0
        %618 = vmatprep.subr.mxu0 0.0
        %619 = vmatpush1.msra.mxu0 0.0
        %620 = vmatprep.subr.mxu0 0.0
        %621 = vmatpush1.msra.mxu0 0.0
        %622 = vmatprep.subr.mxu0 0.0
        %623 = vmatpush1.msra.mxu0 0.0
        %624 = vmatprep.subr.mxu0 0.0
        %625 = vmatpush1.msra.mxu0 0.0
        %626 = vmatprep.subr.mxu0 0.0
        %627 = vmatpush1.msra.mxu0 0.0
        %628 = vmatprep.subr.mxu0 0.0
        %629 = vmatpush1.msra.mxu0 0.0
        %630 = vmatprep.subr.mxu0 0.0
        %631 = vmatpush1.msra.mxu0 0.0
        %632 = vmatprep.subr.mxu0 0.0
        %633 = vmatpush1.msra.mxu0 0.0
        %634 = vmatprep.subr.mxu0 0.0
        %635 = vmatpush1.msra.mxu0 0.0
        %636 = vmatprep.subr.mxu0 0.0
        %637 = vmatpush1.msra.mxu0 0.0
        %638 = vmatprep.subr.mxu0 0.0
        %639 = vmatpush1.msra.mxu0 0.0
        %640 = vmatprep.subr.mxu0 0.0
        %641 = vmatpush1.msra.mxu0 0.0
        %642 = vmatprep.subr.mxu0 0.0
        %643 = vmatpush1.msra.mxu0 0.0
        %644 = vmatprep.subr.mxu0 0.0
        %645 = vmatpush1.msra.mxu0 0.0
        %646 = vmatprep.mubr.f32.mxu0 0.0
        %647 = vmatmul.mubr.f32.gmra.mrb[0].mxu0 %v450
        %v648 = vpop.f32.mrb[0].mxu0
        %v649 = vadd.f32 0.0, %v648
        %v650 = vpop.f32.mrb[0].mxu0
        %651 = vmatprep.mubr.f32.mxu0 0.0
        %652 = vmatmul.mubr.f32.gmra.mrb[0].mxu0 %v453
        %v653 = vpop.f32.mrb[0].mxu0
        %v654 = vadd.f32 0.0, %v653
        %v655 = vpop.f32.mrb[0].mxu0
        %656 = vmatprep.mubr.f32.mxu0 0.0
        %657 = vmatmul.mubr.f32.gmra.mrb[0].mxu0 %v456
        %v658 = vpop.f32.mrb[0].mxu0
        %v659 = vadd.f32 0.0, %v658
        %v660 = vpop.f32.mrb[0].mxu0
        %661 = vmatprep.mubr.f32.mxu0 0.0
        %662 = vmatmul.mubr.f32.gmra.mrb[0].mxu0 %v459
        %v663 = vpop.f32.mrb[0].mxu0
        %v664 = vadd.f32 0.0, %v663
        %v665 = vpop.f32.mrb[0].mxu0
        %666 = vdwg.mxu0
        %667 = vmatprep.subr.mxu0 0.0
        %668 = vmatpush1.msra.mxu0 %v338
        %669 = vmatprep.subr.mxu0 0.0
        %670 = vmatpush1.msra.mxu0 %v339
        %671 = vmatprep.subr.mxu0 0.0
        %672 = vmatpush1.msra.mxu0 %v340
        %673 = vmatprep.subr.mxu0 0.0
        %674 = vmatpush1.msra.mxu0 %v341
        %675 = vmatprep.subr.mxu0 0.0
        %676 = vmatpush1.msra.mxu0 0.0
        %677 = vmatprep.subr.mxu0 0.0
        %678 = vmatpush1.msra.mxu0 0.0
        %679 = vmatprep.subr.mxu0 0.0
        %680 = vmatpush1.msra.mxu0 0.0
        %681 = vmatprep.subr.mxu0 0.0
        %682 = vmatpush1.msra.mxu0 0.0
        %683 = vmatprep.subr.mxu0 0.0
        %684 = vmatpush1.msra.mxu0 0.0
        %685 = vmatprep.subr.mxu0 0.0
        %686 = vmatpush1.msra.mxu0 0.0
        %687 = vmatprep.subr.mxu0 0.0
        %688 = vmatpush1.msra.mxu0 0.0
        %689 = vmatprep.subr.mxu0 0.0
        %690 = vmatpush1.msra.mxu0 0.0
        %691 = vmatprep.subr.mxu0 0.0
        %692 = vmatpush1.msra.mxu0 0.0
        %693 = vmatprep.subr.mxu0 0.0
        %694 = vmatpush1.msra.mxu0 0.0
        %695 = vmatprep.subr.mxu0 0.0
        %696 = vmatpush1.msra.mxu0 0.0
        %697 = vmatprep.subr.mxu0 0.0
        %698 = vmatpush1.msra.mxu0 0.0
        %699 = vmatprep.subr.mxu0 0.0
        %700 = vmatpush1.msra.mxu0 0.0
        %701 = vmatprep.subr.mxu0 0.0
        %702 = vmatpush1.msra.mxu0 0.0
        %703 = vmatprep.subr.mxu0 0.0
        %704 = vmatpush1.msra.mxu0 0.0
        %705 = vmatprep.subr.mxu0 0.0
        %706 = vmatpush1.msra.mxu0 0.0
        %707 = vmatprep.subr.mxu0 0.0
        %708 = vmatpush1.msra.mxu0 0.0
        %709 = vmatprep.subr.mxu0 0.0
        %710 = vmatpush1.msra.mxu0 0.0
        %711 = vmatprep.subr.mxu0 0.0
        %712 = vmatpush1.msra.mxu0 0.0
        %713 = vmatprep.subr.mxu0 0.0
        %714 = vmatpush1.msra.mxu0 0.0
        %715 = vmatprep.subr.mxu0 0.0
        %716 = vmatpush1.msra.mxu0 0.0
        %717 = vmatprep.subr.mxu0 0.0
        %718 = vmatpush1.msra.mxu0 0.0
        %719 = vmatprep.subr.mxu0 0.0
        %720 = vmatpush1.msra.mxu0 0.0
        %721 = vmatprep.subr.mxu0 0.0
        %722 = vmatpush1.msra.mxu0 0.0
        %723 = vmatprep.subr.mxu0 0.0
        %724 = vmatpush1.msra.mxu0 0.0
        %725 = vmatprep.subr.mxu0 0.0
        %726 = vmatpush1.msra.mxu0 0.0
        %727 = vmatprep.subr.mxu0 0.0
        %728 = vmatpush1.msra.mxu0 0.0
        %729 = vmatprep.subr.mxu0 0.0
        %730 = vmatpush1.msra.mxu0 0.0
        %731 = vmatprep.mubr.f32.mxu0 0.0
        %732 = vmatmul.mubr.f32.gmra.mrb[0].mxu0 %v353
        %v733 = vpop.f32.mrb[0].mxu0
        %v734 = vadd.f32 %v649, %v733
        %v735 = vpop.f32.mrb[0].mxu0
        %736 = vmatprep.mubr.f32.mxu0 0.0
        %737 = vmatmul.mubr.f32.gmra.mrb[0].mxu0 %v356
        %v738 = vpop.f32.mrb[0].mxu0
        %v739 = vadd.f32 %v654, %v738
        %v740 = vpop.f32.mrb[0].mxu0
        %741 = vmatprep.mubr.f32.mxu0 0.0
        %742 = vmatmul.mubr.f32.gmra.mrb[0].mxu0 %v359
        %v743 = vpop.f32.mrb[0].mxu0
        %v744 = vadd.f32 %v659, %v743
        %v745 = vpop.f32.mrb[0].mxu0
        %746 = vmatprep.mubr.f32.mxu0 0.0
        %747 = vmatmul.mubr.f32.gmra.mrb[0].mxu0 %v362
        %v748 = vpop.f32.mrb[0].mxu0
        %v749 = vadd.f32 %v664, %v748
        %v750 = vpop.f32.mrb[0].mxu0
        %751 = vdwg.mxu0
        %s752 = scalar_lea.vmem %s3, 32
        %v753 = vld [vmem:[%s752] sm:$0xff]
        %v754 = vld [vmem:[%s752 + $0x8] sm:$0xff]
        %v755 = vld [vmem:[%s752 + $0x10] sm:$0xff]
        %v756 = vld [vmem:[%s752 + $0x18] sm:$0xff]
        %758 = vset.pattern.permute.xlu0 0
        %759 = vperm.xlu0 %758, %v753
        %v760 = vpop.permute.xlu0 %759
        %763 = vset.pattern.permute.xlu0 0
        %764 = vperm.xlu0 %763, %v754
        %v765 = vpop.permute.xlu0 %764
        %768 = vset.pattern.permute.xlu0 0
        %769 = vperm.xlu0 %768, %v755
        %v770 = vpop.permute.xlu0 %769
        %773 = vset.pattern.permute.xlu0 0
        %774 = vperm.xlu0 %773, %v756
        %v775 = vpop.permute.xlu0 %774
        %v777 = vadd.f32 %v734, %v760
        %v778 = vadd.f32 %v739, %v765
        %v779 = vadd.f32 %v744, %v770
        %v780 = vadd.f32 %v749, %v775
        %v781 = vmax.f32 %v777, 0.0
        %v782 = vmax.f32 %v778, 0.0
        %v783 = vmax.f32 %v779, 0.0
        %v784 = vmax.f32 %v780, 0.0
        %v785 = vld [vmem:[#allocation6] sm:$0xff]
        %v786 = vld [vmem:[#allocation6 + $0x8] sm:$0xff]
        %v787 = vld [vmem:[#allocation6 + $0x10] sm:$0xff]
        %v788 = vld [vmem:[#allocation6 + $0x18] sm:$0xff]
        %s789 = scalar_lea.vmem [#allocation6], 32
        %v790 = vld [vmem:[%s789] sm:$0xff]
        %v791 = vld [vmem:[%s789 + $0x8] sm:$0xff]
        %v792 = vld [vmem:[%s789 + $0x10] sm:$0xff]
        %v793 = vld [vmem:[%s789 + $0x18] sm:$0xff]
        %v795 = vsel %vm351, %v785, 0
        %v798 = vsel %vm351, %v786, 0
        %v801 = vsel %vm351, %v787, 0
        %v804 = vsel %vm351, %v788, 0
        %806 = vmatprep.subr.mxu0 0.0
        %807 = vmatpush1.msra.mxu0 %v578
        %808 = vmatprep.subr.mxu0 0.0
        %809 = vmatpush1.msra.mxu0 %v579
        %810 = vmatprep.subr.mxu0 0.0
        %811 = vmatpush1.msra.mxu0 %v580
        %812 = vmatprep.subr.mxu0 0.0
        %813 = vmatpush1.msra.mxu0 %v581
        %814 = vmatprep.subr.mxu0 0.0
        %815 = vmatpush1.msra.mxu0 0.0
        %816 = vmatprep.subr.mxu0 0.0
        %817 = vmatpush1.msra.mxu0 0.0
        %818 = vmatprep.subr.mxu0 0.0
        %819 = vmatpush1.msra.mxu0 0.0
        %820 = vmatprep.subr.mxu0 0.0
        %821 = vmatpush1.msra.mxu0 0.0
        %822 = vmatprep.subr.mxu0 0.0
        %823 = vmatpush1.msra.mxu0 0.0
        %824 = vmatprep.subr.mxu0 0.0
        %825 = vmatpush1.msra.mxu0 0.0
        %826 = vmatprep.subr.mxu0 0.0
        %827 = vmatpush1.msra.mxu0 0.0
        %828 = vmatprep.subr.mxu0 0.0
        %829 = vmatpush1.msra.mxu0 0.0
        %830 = vmatprep.subr.mxu0 0.0
        %831 = vmatpush1.msra.mxu0 0.0
        %832 = vmatprep.subr.mxu0 0.0
        %833 = vmatpush1.msra.mxu0 0.0
        %834 = vmatprep.subr.mxu0 0.0
        %835 = vmatpush1.msra.mxu0 0.0
        %836 = vmatprep.subr.mxu0 0.0
        %837 = vmatpush1.msra.mxu0 0.0
        %838 = vmatprep.subr.mxu0 0.0
        %839 = vmatpush1.msra.mxu0 0.0
        %840 = vmatprep.subr.mxu0 0.0
        %841 = vmatpush1.msra.mxu0 0.0
        %842 = vmatprep.subr.mxu0 0.0
        %843 = vmatpush1.msra.mxu0 0.0
        %844 = vmatprep.subr.mxu0 0.0
        %845 = vmatpush1.msra.mxu0 0.0
        %846 = vmatprep.subr.mxu0 0.0
        %847 = vmatpush1.msra.mxu0 0.0
        %848 = vmatprep.subr.mxu0 0.0
        %849 = vmatpush1.msra.mxu0 0.0
        %850 = vmatprep.subr.mxu0 0.0
        %851 = vmatpush1.msra.mxu0 0.0
        %852 = vmatprep.subr.mxu0 0.0
        %853 = vmatpush1.msra.mxu0 0.0
        %854 = vmatprep.subr.mxu0 0.0
        %855 = vmatpush1.msra.mxu0 0.0
        %856 = vmatprep.subr.mxu0 0.0
        %857 = vmatpush1.msra.mxu0 0.0
        %858 = vmatprep.subr.mxu0 0.0
        %859 = vmatpush1.msra.mxu0 0.0
        %860 = vmatprep.subr.mxu0 0.0
        %861 = vmatpush1.msra.mxu0 0.0
        %862 = vmatprep.subr.mxu0 0.0
        %863 = vmatpush1.msra.mxu0 0.0
        %864 = vmatprep.subr.mxu0 0.0
        %865 = vmatpush1.msra.mxu0 0.0
        %866 = vmatprep.subr.mxu0 0.0
        %867 = vmatpush1.msra.mxu0 0.0
        %868 = vmatprep.subr.mxu0 0.0
        %869 = vmatpush1.msra.mxu0 0.0
        %870 = vmatprep.mubr.f32.mxu0 0.0
        %871 = vmatmul.mubr.f32.gmra.mrb[0].mxu0 %v795
        %v872 = vpop.f32.mrb[0].mxu0
        %v873 = vadd.f32 0.0, %v872
        %v874 = vpop.f32.mrb[0].mxu0
        %875 = vmatprep.mubr.f32.mxu0 0.0
        %876 = vmatmul.mubr.f32.gmra.mrb[0].mxu0 %v798
        %v877 = vpop.f32.mrb[0].mxu0
        %v878 = vadd.f32 0.0, %v877
        %v879 = vpop.f32.mrb[0].mxu0
        %880 = vmatprep.mubr.f32.mxu0 0.0
        %881 = vmatmul.mubr.f32.gmra.mrb[0].mxu0 %v801
        %v882 = vpop.f32.mrb[0].mxu0
        %v883 = vadd.f32 0.0, %v882
        %v884 = vpop.f32.mrb[0].mxu0
        %885 = vmatprep.mubr.f32.mxu0 0.0
        %886 = vmatmul.mubr.f32.gmra.mrb[0].mxu0 %v804
        %v887 = vpop.f32.mrb[0].mxu0
        %v888 = vadd.f32 0.0, %v887
        %v889 = vpop.f32.mrb[0].mxu0
        %890 = vdwg.mxu0
        %v892 = vsel %vm351, %v790, 0
        %v895 = vsel %vm351, %v791, 0
        %v898 = vsel %vm351, %v792, 0
        %v901 = vsel %vm351, %v793, 0
        %903 = vmatprep.subr.mxu0 0.0
        %904 = vmatpush1.msra.mxu0 %v781
        %905 = vmatprep.subr.mxu0 0.0
        %906 = vmatpush1.msra.mxu0 %v782
        %907 = vmatprep.subr.mxu0 0.0
        %908 = vmatpush1.msra.mxu0 %v783
        %909 = vmatprep.subr.mxu0 0.0
        %910 = vmatpush1.msra.mxu0 %v784
        %911 = vmatprep.subr.mxu0 0.0
        %912 = vmatpush1.msra.mxu0 0.0
        %913 = vmatprep.subr.mxu0 0.0
        %914 = vmatpush1.msra.mxu0 0.0
        %915 = vmatprep.subr.mxu0 0.0
        %916 = vmatpush1.msra.mxu0 0.0
        %917 = vmatprep.subr.mxu0 0.0
        %918 = vmatpush1.msra.mxu0 0.0
        %919 = vmatprep.subr.mxu0 0.0
        %920 = vmatpush1.msra.mxu0 0.0
        %921 = vmatprep.subr.mxu0 0.0
        %922 = vmatpush1.msra.mxu0 0.0
        %923 = vmatprep.subr.mxu0 0.0
        %924 = vmatpush1.msra.mxu0 0.0
        %925 = vmatprep.subr.mxu0 0.0
        %926 = vmatpush1.msra.mxu0 0.0
        %927 = vmatprep.subr.mxu0 0.0
        %928 = vmatpush1.msra.mxu0 0.0
        %929 = vmatprep.subr.mxu0 0.0
        %930 = vmatpush1.msra.mxu0 0.0
        %931 = vmatprep.subr.mxu0 0.0
        %932 = vmatpush1.msra.mxu0 0.0
        %933 = vmatprep.subr.mxu0 0.0
        %934 = vmatpush1.msra.mxu0 0.0
        %935 = vmatprep.subr.mxu0 0.0
        %936 = vmatpush1.msra.mxu0 0.0
        %937 = vmatprep.subr.mxu0 0.0
        %938 = vmatpush1.msra.mxu0 0.0
        %939 = vmatprep.subr.mxu0 0.0
        %940 = vmatpush1.msra.mxu0 0.0
        %941 = vmatprep.subr.mxu0 0.0
        %942 = vmatpush1.msra.mxu0 0.0
        %943 = vmatprep.subr.mxu0 0.0
        %944 = vmatpush1.msra.mxu0 0.0
        %945 = vmatprep.subr.mxu0 0.0
        %946 = vmatpush1.msra.mxu0 0.0
        %947 = vmatprep.subr.mxu0 0.0
        %948 = vmatpush1.msra.mxu0 0.0
        %949 = vmatprep.subr.mxu0 0.0
        %950 = vmatpush1.msra.mxu0 0.0
        %951 = vmatprep.subr.mxu0 0.0
        %952 = vmatpush1.msra.mxu0 0.0
        %953 = vmatprep.subr.mxu0 0.0
        %954 = vmatpush1.msra.mxu0 0.0
        %955 = vmatprep.subr.mxu0 0.0
        %956 = vmatpush1.msra.mxu0 0.0
        %957 = vmatprep.subr.mxu0 0.0
        %958 = vmatpush1.msra.mxu0 0.0
        %959 = vmatprep.subr.mxu0 0.0
        %960 = vmatpush1.msra.mxu0 0.0
        %961 = vmatprep.subr.mxu0 0.0
        %962 = vmatpush1.msra.mxu0 0.0
        %963 = vmatprep.subr.mxu0 0.0
        %964 = vmatpush1.msra.mxu0 0.0
        %965 = vmatprep.subr.mxu0 0.0
        %966 = vmatpush1.msra.mxu0 0.0
        %967 = vmatprep.mubr.f32.mxu0 0.0
        %968 = vmatmul.mubr.f32.gmra.mrb[0].mxu0 %v892
        %v969 = vpop.f32.mrb[0].mxu0
        %v970 = vadd.f32 0.0, %v969
        %v971 = vpop.f32.mrb[0].mxu0
        %972 = vmatprep.mubr.f32.mxu0 0.0
        %973 = vmatmul.mubr.f32.gmra.mrb[0].mxu0 %v895
        %v974 = vpop.f32.mrb[0].mxu0
        %v975 = vadd.f32 0.0, %v974
        %v976 = vpop.f32.mrb[0].mxu0
        %977 = vmatprep.mubr.f32.mxu0 0.0
        %978 = vmatmul.mubr.f32.gmra.mrb[0].mxu0 %v898
        %v979 = vpop.f32.mrb[0].mxu0
        %v980 = vadd.f32 0.0, %v979
        %v981 = vpop.f32.mrb[0].mxu0
        %982 = vmatprep.mubr.f32.mxu0 0.0
        %983 = vmatmul.mubr.f32.gmra.mrb[0].mxu0 %v901
        %v984 = vpop.f32.mrb[0].mxu0
        %v985 = vadd.f32 0.0, %v984
        %v986 = vpop.f32.mrb[0].mxu0
        %987 = vdwg.mxu0
        %v988 = vsub.f32 %v873, %v970
        %v989 = vsub.f32 %v878, %v975
        %v990 = vsub.f32 %v883, %v980
        %v991 = vsub.f32 %v888, %v985
        %v992 = vld [vmem:[%s4] sm:$0xff]
        %v993 = vld [vmem:[%s4 + $0x8] sm:$0xff]
        %v994 = vld [vmem:[%s4 + $0x10] sm:$0xff]
        %v995 = vld [vmem:[%s4 + $0x18] sm:$0xff]
        %997 = vset.pattern.permute.xlu0 0
        %998 = vperm.xlu0 %997, %v992
        %v999 = vpop.permute.xlu0 %998
        %1002 = vset.pattern.permute.xlu0 0
        %1003 = vperm.xlu0 %1002, %v993
        %v1004 = vpop.permute.xlu0 %1003
        %1007 = vset.pattern.permute.xlu0 0
        %1008 = vperm.xlu0 %1007, %v994
        %v1009 = vpop.permute.xlu0 %1008
        %1012 = vset.pattern.permute.xlu0 0
        %1013 = vperm.xlu0 %1012, %v995
        %v1014 = vpop.permute.xlu0 %1013
        %v1016 = vadd.f32 %v988, %v999
        %v1017 = vadd.f32 %v989, %v1004
        %v1018 = vadd.f32 %v990, %v1009
        %v1019 = vadd.f32 %v991, %v1014
        %vm1020 = vcmp.gt.f32.partialorder %v1016, 0.01
        %vm1021 = vcmp.gt.f32.partialorder %v1017, 0.01
        %vm1022 = vcmp.gt.f32.partialorder %v1018, 0.01
        %vm1023 = vcmp.gt.f32.partialorder %v1019, 0.01
        %v1024 = vsub.f32 %v1016, 0.01
        %v1025 = vsub.f32 %v1017, 0.01
        %v1026 = vsub.f32 %v1018, 0.01
        %v1027 = vsub.f32 %v1019, 0.01
        %vm1028 = vcmp.lt.f32.partialorder %v1016, -0.01
        %vm1029 = vcmp.lt.f32.partialorder %v1017, -0.01
        %vm1030 = vcmp.lt.f32.partialorder %v1018, -0.01
        %vm1031 = vcmp.lt.f32.partialorder %v1019, -0.01
        %v1032 = vadd.f32 %v1016, 0.01
        %v1033 = vadd.f32 %v1017, 0.01
        %v1034 = vadd.f32 %v1018, 0.01
        %v1035 = vadd.f32 %v1019, 0.01
        %v1036 = vsel %vm1028, %v1032, 0.0
        %v1037 = vsel %vm1029, %v1033, 0.0
        %v1038 = vsel %vm1030, %v1034, 0.0
        %v1039 = vsel %vm1031, %v1035, 0.0
        %v1040 = vsel %vm1020, %v1024, %v1036
        %v1041 = vsel %vm1021, %v1025, %v1037
        %v1042 = vsel %vm1022, %v1026, %v1038
        %v1043 = vsel %vm1023, %v1027, %v1039
        %1044 = vst [vmem:[%s332] sm:$0xff] %v1040
        %1045 = vst [vmem:[%s332 + $0x8] sm:$0xff] %v1041
        %1046 = vst [vmem:[%s332 + $0x10] sm:$0xff] %v1042
        %1047 = vst [vmem:[%s332 + $0x18] sm:$0xff] %v1043
        %1048 = vmatprep.subr.mxu0 0.0
        %1049 = vmatpush1.msra.mxu0 %v578
        %1050 = vmatprep.subr.mxu0 0.0
        %1051 = vmatpush1.msra.mxu0 %v579
        %1052 = vmatprep.subr.mxu0 0.0
        %1053 = vmatpush1.msra.mxu0 %v580
        %1054 = vmatprep.subr.mxu0 0.0
        %1055 = vmatpush1.msra.mxu0 %v581
        %1056 = vmatprep.subr.mxu0 0.0
        %1057 = vmatpush1.msra.mxu0 0.0
        %1058 = vmatprep.subr.mxu0 0.0
        %1059 = vmatpush1.msra.mxu0 0.0
        %1060 = vmatprep.subr.mxu0 0.0
        %1061 = vmatpush1.msra.mxu0 0.0
        %1062 = vmatprep.subr.mxu0 0.0
        %1063 = vmatpush1.msra.mxu0 0.0
        %1064 = vmatprep.subr.mxu0 0.0
        %1065 = vmatpush1.msra.mxu0 0.0
        %1066 = vmatprep.subr.mxu0 0.0
        %1067 = vmatpush1.msra.mxu0 0.0
        %1068 = vmatprep.subr.mxu0 0.0
        %1069 = vmatpush1.msra.mxu0 0.0
        %1070 = vmatprep.subr.mxu0 0.0
        %1071 = vmatpush1.msra.mxu0 0.0
        %1072 = vmatprep.subr.mxu0 0.0
        %1073 = vmatpush1.msra.mxu0 0.0
        %1074 = vmatprep.subr.mxu0 0.0
        %1075 = vmatpush1.msra.mxu0 0.0
        %1076 = vmatprep.subr.mxu0 0.0
        %1077 = vmatpush1.msra.mxu0 0.0
        %1078 = vmatprep.subr.mxu0 0.0
        %1079 = vmatpush1.msra.mxu0 0.0
        %1080 = vmatprep.subr.mxu0 0.0
        %1081 = vmatpush1.msra.mxu0 0.0
        %1082 = vmatprep.subr.mxu0 0.0
        %1083 = vmatpush1.msra.mxu0 0.0
        %1084 = vmatprep.subr.mxu0 0.0
        %1085 = vmatpush1.msra.mxu0 0.0
        %1086 = vmatprep.subr.mxu0 0.0
        %1087 = vmatpush1.msra.mxu0 0.0
        %1088 = vmatprep.subr.mxu0 0.0
        %1089 = vmatpush1.msra.mxu0 0.0
        %1090 = vmatprep.subr.mxu0 0.0
        %1091 = vmatpush1.msra.mxu0 0.0
        %1092 = vmatprep.subr.mxu0 0.0
        %1093 = vmatpush1.msra.mxu0 0.0
        %1094 = vmatprep.subr.mxu0 0.0
        %1095 = vmatpush1.msra.mxu0 0.0
        %1096 = vmatprep.subr.mxu0 0.0
        %1097 = vmatpush1.msra.mxu0 0.0
        %1098 = vmatprep.subr.mxu0 0.0
        %1099 = vmatpush1.msra.mxu0 0.0
        %1100 = vmatprep.subr.mxu0 0.0
        %1101 = vmatpush1.msra.mxu0 0.0
        %1102 = vmatprep.subr.mxu0 0.0
        %1103 = vmatpush1.msra.mxu0 0.0
        %1104 = vmatprep.subr.mxu0 0.0
        %1105 = vmatpush1.msra.mxu0 0.0
        %1106 = vmatprep.subr.mxu0 0.0
        %1107 = vmatpush1.msra.mxu0 0.0
        %1108 = vmatprep.subr.mxu0 0.0
        %1109 = vmatpush1.msra.mxu0 0.0
        %1110 = vmatprep.subr.mxu0 0.0
        %1111 = vmatpush1.msra.mxu0 0.0
        %1112 = vmatprep.mubr.f32.mxu0 0.0
        %1113 = vmatmul.mubr.f32.gmra.mrb[0].mxu0 %v892
        %v1114 = vpop.f32.mrb[0].mxu0
        %v1115 = vadd.f32 0.0, %v1114
        %v1116 = vpop.f32.mrb[0].mxu0
        %1117 = vmatprep.mubr.f32.mxu0 0.0
        %1118 = vmatmul.mubr.f32.gmra.mrb[0].mxu0 %v895
        %v1119 = vpop.f32.mrb[0].mxu0
        %v1120 = vadd.f32 0.0, %v1119
        %v1121 = vpop.f32.mrb[0].mxu0
        %1122 = vmatprep.mubr.f32.mxu0 0.0
        %1123 = vmatmul.mubr.f32.gmra.mrb[0].mxu0 %v898
        %v1124 = vpop.f32.mrb[0].mxu0
        %v1125 = vadd.f32 0.0, %v1124
        %v1126 = vpop.f32.mrb[0].mxu0
        %1127 = vmatprep.mubr.f32.mxu0 0.0
        %1128 = vmatmul.mubr.f32.gmra.mrb[0].mxu0 %v901
        %v1129 = vpop.f32.mrb[0].mxu0
        %v1130 = vadd.f32 0.0, %v1129
        %v1131 = vpop.f32.mrb[0].mxu0
        %1132 = vdwg.mxu0
        %1133 = vmatprep.subr.mxu0 0.0
        %1134 = vmatpush1.msra.mxu0 %v781
        %1135 = vmatprep.subr.mxu0 0.0
        %1136 = vmatpush1.msra.mxu0 %v782
        %1137 = vmatprep.subr.mxu0 0.0
        %1138 = vmatpush1.msra.mxu0 %v783
        %1139 = vmatprep.subr.mxu0 0.0
        %1140 = vmatpush1.msra.mxu0 %v784
        %1141 = vmatprep.subr.mxu0 0.0
        %1142 = vmatpush1.msra.mxu0 0.0
        %1143 = vmatprep.subr.mxu0 0.0
        %1144 = vmatpush1.msra.mxu0 0.0
        %1145 = vmatprep.subr.mxu0 0.0
        %1146 = vmatpush1.msra.mxu0 0.0
        %1147 = vmatprep.subr.mxu0 0.0
        %1148 = vmatpush1.msra.mxu0 0.0
        %1149 = vmatprep.subr.mxu0 0.0
        %1150 = vmatpush1.msra.mxu0 0.0
        %1151 = vmatprep.subr.mxu0 0.0
        %1152 = vmatpush1.msra.mxu0 0.0
        %1153 = vmatprep.subr.mxu0 0.0
        %1154 = vmatpush1.msra.mxu0 0.0
        %1155 = vmatprep.subr.mxu0 0.0
        %1156 = vmatpush1.msra.mxu0 0.0
        %1157 = vmatprep.subr.mxu0 0.0
        %1158 = vmatpush1.msra.mxu0 0.0
        %1159 = vmatprep.subr.mxu0 0.0
        %1160 = vmatpush1.msra.mxu0 0.0
        %1161 = vmatprep.subr.mxu0 0.0
        %1162 = vmatpush1.msra.mxu0 0.0
        %1163 = vmatprep.subr.mxu0 0.0
        %1164 = vmatpush1.msra.mxu0 0.0
        %1165 = vmatprep.subr.mxu0 0.0
        %1166 = vmatpush1.msra.mxu0 0.0
        %1167 = vmatprep.subr.mxu0 0.0
        %1168 = vmatpush1.msra.mxu0 0.0
        %1169 = vmatprep.subr.mxu0 0.0
        %1170 = vmatpush1.msra.mxu0 0.0
        %1171 = vmatprep.subr.mxu0 0.0
        %1172 = vmatpush1.msra.mxu0 0.0
        %1173 = vmatprep.subr.mxu0 0.0
        %1174 = vmatpush1.msra.mxu0 0.0
        %1175 = vmatprep.subr.mxu0 0.0
        %1176 = vmatpush1.msra.mxu0 0.0
        %1177 = vmatprep.subr.mxu0 0.0
        %1178 = vmatpush1.msra.mxu0 0.0
        %1179 = vmatprep.subr.mxu0 0.0
        %1180 = vmatpush1.msra.mxu0 0.0
        %1181 = vmatprep.subr.mxu0 0.0
        %1182 = vmatpush1.msra.mxu0 0.0
        %1183 = vmatprep.subr.mxu0 0.0
        %1184 = vmatpush1.msra.mxu0 0.0
        %1185 = vmatprep.subr.mxu0 0.0
        %1186 = vmatpush1.msra.mxu0 0.0
        %1187 = vmatprep.subr.mxu0 0.0
        %1188 = vmatpush1.msra.mxu0 0.0
        %1189 = vmatprep.subr.mxu0 0.0
        %1190 = vmatpush1.msra.mxu0 0.0
        %1191 = vmatprep.subr.mxu0 0.0
        %1192 = vmatpush1.msra.mxu0 0.0
        %1193 = vmatprep.subr.mxu0 0.0
        %1194 = vmatpush1.msra.mxu0 0.0
        %1195 = vmatprep.subr.mxu0 0.0
        %1196 = vmatpush1.msra.mxu0 0.0
        %1197 = vmatprep.mubr.f32.mxu0 0.0
        %1198 = vmatmul.mubr.f32.gmra.mrb[0].mxu0 %v795
        %v1199 = vpop.f32.mrb[0].mxu0
        %v1200 = vadd.f32 %v1115, %v1199
        %v1201 = vpop.f32.mrb[0].mxu0
        %1202 = vmatprep.mubr.f32.mxu0 0.0
        %1203 = vmatmul.mubr.f32.gmra.mrb[0].mxu0 %v798
        %v1204 = vpop.f32.mrb[0].mxu0
        %v1205 = vadd.f32 %v1120, %v1204
        %v1206 = vpop.f32.mrb[0].mxu0
        %1207 = vmatprep.mubr.f32.mxu0 0.0
        %1208 = vmatmul.mubr.f32.gmra.mrb[0].mxu0 %v801
        %v1209 = vpop.f32.mrb[0].mxu0
        %v1210 = vadd.f32 %v1125, %v1209
        %v1211 = vpop.f32.mrb[0].mxu0
        %1212 = vmatprep.mubr.f32.mxu0 0.0
        %1213 = vmatmul.mubr.f32.gmra.mrb[0].mxu0 %v804
        %v1214 = vpop.f32.mrb[0].mxu0
        %v1215 = vadd.f32 %v1130, %v1214
        %v1216 = vpop.f32.mrb[0].mxu0
        %1217 = vdwg.mxu0
        %s1218 = scalar_lea.vmem %s4, 32
        %v1219 = vld [vmem:[%s1218] sm:$0xff]
        %v1220 = vld [vmem:[%s1218 + $0x8] sm:$0xff]
        %v1221 = vld [vmem:[%s1218 + $0x10] sm:$0xff]
        %v1222 = vld [vmem:[%s1218 + $0x18] sm:$0xff]
        %1224 = vset.pattern.permute.xlu0 0
        %1225 = vperm.xlu0 %1224, %v1219
        %v1226 = vpop.permute.xlu0 %1225
        %1229 = vset.pattern.permute.xlu0 0
        %1230 = vperm.xlu0 %1229, %v1220
        %v1231 = vpop.permute.xlu0 %1230
        %1234 = vset.pattern.permute.xlu0 0
        %1235 = vperm.xlu0 %1234, %v1221
        %v1236 = vpop.permute.xlu0 %1235
        %1239 = vset.pattern.permute.xlu0 0
        %1240 = vperm.xlu0 %1239, %v1222
        %v1241 = vpop.permute.xlu0 %1240
        %v1243 = vadd.f32 %v1200, %v1226
        %v1244 = vadd.f32 %v1205, %v1231
        %v1245 = vadd.f32 %v1210, %v1236
        %v1246 = vadd.f32 %v1215, %v1241
        %vm1247 = vcmp.gt.f32.partialorder %v1243, 0.01
        %vm1248 = vcmp.gt.f32.partialorder %v1244, 0.01
        %vm1249 = vcmp.gt.f32.partialorder %v1245, 0.01
        %vm1250 = vcmp.gt.f32.partialorder %v1246, 0.01
        %v1251 = vsub.f32 %v1243, 0.01
        %v1252 = vsub.f32 %v1244, 0.01
        %v1253 = vsub.f32 %v1245, 0.01
        %v1254 = vsub.f32 %v1246, 0.01
        %vm1255 = vcmp.lt.f32.partialorder %v1243, -0.01
        %vm1256 = vcmp.lt.f32.partialorder %v1244, -0.01
        %vm1257 = vcmp.lt.f32.partialorder %v1245, -0.01
        %vm1258 = vcmp.lt.f32.partialorder %v1246, -0.01
        %v1259 = vadd.f32 %v1243, 0.01
        %v1260 = vadd.f32 %v1244, 0.01
        %v1261 = vadd.f32 %v1245, 0.01
        %v1262 = vadd.f32 %v1246, 0.01
        %v1263 = vsel %vm1255, %v1259, 0.0
        %v1264 = vsel %vm1256, %v1260, 0.0
        %v1265 = vsel %vm1257, %v1261, 0.0
        %v1266 = vsel %vm1258, %v1262, 0.0
        %v1267 = vsel %vm1247, %v1251, %v1263
        %v1268 = vsel %vm1248, %v1252, %v1264
        %v1269 = vsel %vm1249, %v1253, %v1265
        %v1270 = vsel %vm1250, %v1254, %v1266
        %s1271 = scalar_lea.vmem %s332, 32 [#allocation8]
        %1272 = vst [vmem:[%s1271] sm:$0xff] %v1267
        %1273 = vst [vmem:[%s1271 + $0x8] sm:$0xff] %v1268
        %1274 = vst [vmem:[%s1271 + $0x10] sm:$0xff] %v1269
        %1275 = vst [vmem:[%s1271 + $0x18] sm:$0xff] %v1270
        %s1276 = sand.u32 %s155, 1
        %s1277 = scalar_lea.sflag [#allocation5], %s1276
        %s1278 = sand.u32 %s155, 1
        %s1279 = smul.addr %s1278, 64
        %s1280 = scalar_lea.vmem [#allocation8], %s1279
        // Predicated region
        $region87: #{tpu_custom_call.1} parent=73 // pred_check
          %p1281 = pneg %p165
        $region88: #{tpu_custom_call.1} parent=73 // pred_check_branch
          %1283 = sbr.rel (%p1281) target = $region90
        $region89: #{tpu_custom_call.1} parent=73 // pred_region
          #allocation10 [shape = 'u32[6]{0}', space=smem, size = 0x18, scoped, tag = 'DMA stride descriptor']
          %s1285 = ssub.s32 1024, 1024
          %1286 = vsyncadd %s1277, %s1285
          %s1287 = smul.addr %s25, 4
          %s1288 = sadd.s32 %s26, %s1287
          %s1289 = smul.addr %s1288, 128
          %s1290 = scalar_lea.hbm %s5, %s1289
          %s1292 = sshll.u32 1, 14
          %s1293 = sxor.u32 4294967295, %s1292
          %s1296 = sshll.u32 7, 18
          %s1297 = sxor.u32 4294967295, %s1296
          %s1298 = sand.u32 0, %s1297
          %s1300 = sor.u32 %s1298, 0
          %s1302 = sshll.u32 3, 24
          %s1303 = sxor.u32 4294967295, %s1302
          %s1304 = sand.u32 %s1300, %s1303
          %s1306 = sor.u32 %s1304, 0
          %s1307 = sshll.u32 %s1280, 4
          %s1308 = int_to_ptr.vmem [resolvable:$true] %s1307
          %1314 = sst [smem:[#allocation10]] 512
          %s1315 = scalar_lea.smem [#allocation10], 1
          %1316 = sst [smem:[%s1315]] 1024
          %s1317 = scalar_lea.smem [#allocation10], 2
          %1318 = sst [smem:[%s1317]] 4
          %s1319 = scalar_lea.smem [#allocation10], 3
          %1320 = sst [smem:[%s1319]] 128
          %s1321 = scalar_lea.smem [#allocation10], 4
          %1322 = sst [smem:[%s1321]] 128
          %s1323 = scalar_lea.smem [#allocation10], 5
          %1324 = sst [smem:[%s1323]] 8
          %1326 = dma.general %s1308, 1024, %s1290, %s1277, [#allocation9], [#allocation10], %s1306, 0
        $region90: #{tpu_custom_call.1} parent=73 // pred_fallthru
          _
      $region74: #{tpu_custom_call.1} parent=5 // pred_fallthru
        _
      %p1327 = scmp.le.s32.totalorder 2, %s16
      // Predicated region
      $region91: #{tpu_custom_call.1} parent=5 // pred_check
        %p1328 = pneg %p1327
      $region92: #{tpu_custom_call.1} parent=5 // pred_check_branch
        %1330 = sbr.rel (%p1328) target = $region94
      $region93: #{tpu_custom_call.1} parent=5 // pred_region
        %s1331 = ssub.s32 %s16, 2
        // Predicated region
        $region95: #{tpu_custom_call.1} parent=93 // pred_check
          %p1332 = pneg %p171
        $region96: #{tpu_custom_call.1} parent=93 // pred_check_branch
          %1334 = sbr.rel (%p1332) target = $region98
        $region97: #{tpu_custom_call.1} parent=93 // pred_region
          %s1335 = sand.u32 %s156, 1
          %s1336 = scalar_lea.sflag [#allocation5], %s1335
          %s1337 = sand.u32 %s156, 1
          %s1338 = smul.addr %s1337, 64
          %s1339 = scalar_lea.vmem [#allocation8], %s1338
          %1340 = dma.done %s1336, 1024
        $region98: #{tpu_custom_call.1} parent=93 // pred_fallthru
          _
      $region94: #{tpu_custom_call.1} parent=5 // pred_fallthru
        _
    $region6: #{tpu_custom_call.1} parent=1 // loop_footer
      %s20 = sadd.s32 1, %s16
    $region7: #{tpu_custom_call.1} parent=1 // loop_footer_branch
      %15 = sbr.rel target = $region3
    $region8: #{tpu_custom_call.1} parent=1 // loop_exit
      _
    %1341 = vsyncpa [#allocation4], 1
    %s1342 = scalar_lea.sflag [#allocation4], 1
    %1343 = vsyncpa %s1342, 1
    %1344 = vsyncpa [#allocation7], 1
    %1345 = vsyncpa [#allocation5], 1
    %s1346 = scalar_lea.sflag [#allocation5], 1
    %1347 = vsyncpa %s1346, 1

</llo_original>
